<compile_context>
chip_gen: v7x
topology: tpu7x:2x2x1
jax: 0.10.0
libtpu: 0.0.40
codegen_flags: <defaults>
</compile_context>

<pallas_src>
from functools import partial

import jax
import jax.numpy as jnp
from jax.experimental import pallas as pl
from jax.experimental.pallas import tpu as pltpu


def _round_up(v, m):
    return (v + m - 1) // m * m


# --------------------------- fused GRU + FC kernel ---------------------------
def make_fused_kernel(n_layers, T, B_pad, H, G_pad):
    """Fused multi-layer GRU + relu + Linear head, gridless (all in VMEM).

    Positional ref layout:
      x2d, h0, [w_ih, w_hh, b_gi, b_hn] * n_layers, fc_w, fc_b,
      out, h_out, gi_scratch, seq_scratch
    """

    def kernel(*refs):
        x_ref, h0_ref = refs[0], refs[1]
        layer_refs = refs[2:2 + 4 * n_layers]
        fc_w_ref = refs[2 + 4 * n_layers]
        fc_b_ref = refs[3 + 4 * n_layers]
        out_ref = refs[4 + 4 * n_layers]
        hout_ref = refs[5 + 4 * n_layers]
        gi_ref = refs[6 + 4 * n_layers]      # (T*B_pad, G_pad) f32 scratch
        seq_ref = refs[7 + 4 * n_layers]     # (T*B_pad, H)     f32 scratch

        h_last = None
        for l in range(n_layers):            # unrolled at trace time
            w_ih_ref, w_hh_ref, b_gi_ref, b_hn_ref = layer_refs[4 * l:4 * l + 4]

            # Hoisted input projection: one big MXU matmul for the whole
            # sequence, off the sequential critical path. b_ih and the r/z
            # parts of b_hh are pre-fused into b_gi at prepare time.
            x_in = x_ref[...] if l == 0 else seq_ref[...]
            gi_ref[...] = (
                jnp.dot(x_in.astype(jnp.bfloat16), w_ih_ref[...],
                        preferred_element_type=jnp.float32)
                + b_gi_ref[...])

            # Hoist the b_hn broadcast out of the unrolled loop (JAX does not
            # CSE broadcast_in_dim inside unrolled loops).
            b_hn = jnp.broadcast_to(b_hn_ref[...], (B_pad, H))
            last_layer = (l == n_layers - 1)

            def step(t, h_prev, w_hh_ref=w_hh_ref, b_hn=b_hn,
                     last_layer=last_layer):
                row = pl.multiple_of(t * B_pad, B_pad)
                gi_t = gi_ref[pl.ds(row, B_pad), :]
                # Recurrent weights read per step (small bf16 tile) so Mosaic
                # schedules the loads -- no vreg hoist / spills across the
                # unrolled loop.
                gh = jnp.dot(h_prev.astype(jnp.bfloat16), w_hh_ref[...],
                             preferred_element_type=jnp.float32)
                # Packed gate layout: [r | z | n] contiguous in lanes 0:3H.
                rz = jax.nn.sigmoid(gi_t[:, 0:2 * H] + gh[:, 0:2 * H])
                r = rz[:, 0:H]
                z = rz[:, H:2 * H]
                n = jnp.tanh(gi_t[:, 2 * H:3 * H]
                             + r * (gh[:, 2 * H:3 * H] + b_hn))
                h_new = n + z * (h_prev - n)     # == (1-z)*n + z*h_prev
                if not last_layer:
                    # Last layer's per-step outputs are never consumed; skip
                    # the store (store slot is on the critical path).
                    seq_ref[pl.ds(row, B_pad), :] = h_new
                return h_new

            h_last = jax.lax.fori_loop(0, T, step, h0_ref[l], unroll=True)
            hout_ref[l] = h_last.astype(hout_ref.dtype)

        # FC head on the last step's hidden state, still in vregs:
        # out = relu(h_T) @ W_fc^T + b_fc
        out_ref[...] = (
            jnp.dot(jnp.maximum(h_last, 0.0).astype(jnp.bfloat16),
                    fc_w_ref[...], preferred_element_type=jnp.float32)
            + fc_b_ref[...]).astype(out_ref.dtype)

    return kernel


# --------------------------- one-time weight packing --------------------------
def prepare_params(params):
    """Run ONCE outside the jitted forward.

    Packs the three gates contiguously (no per-gate 128-lane padding), pads the
    packed gate dim to a lane multiple, folds b_hh[r,z] into the hoisted input
    projection bias, and casts MXU weights to bf16.
    """
    H = params["gru_layers"][0]["w_hh_t"].shape[0]
    O = params["fc_w_t"].shape[-1]
    G = 3 * H
    G_pad = _round_up(G, 128)
    O_pad = _round_up(O, 128)

    layers = []
    for p in params["gru_layers"]:
        w_ih = jnp.pad(p["w_ih_t"], ((0, 0), (0, G_pad - G))).astype(jnp.bfloat16)
        w_hh = jnp.pad(p["w_hh_t"], ((0, 0), (0, G_pad - G))).astype(jnp.bfloat16)
        # Fold b_hh for r/z into the hoisted gi bias; only b_hn must stay
        # inside r * (gh_n + b_hn).
        b_gi = p["b_ih"] + jnp.concatenate(
            [p["b_hh"][:, :2 * H], jnp.zeros((1, H), jnp.float32)], axis=-1)
        b_gi = jnp.pad(b_gi, ((0, 0), (0, G_pad - G)))
        b_hn = p["b_hh"][:, 2 * H:]
        layers.append({"w_ih": w_ih, "w_hh": w_hh, "b_gi": b_gi, "b_hn": b_hn})

    fc_w = jnp.pad(params["fc_w_t"], ((0, 0), (0, O_pad - O))).astype(jnp.bfloat16)
    fc_b = jnp.pad(params["fc_b"], ((0, 0), (0, O_pad - O)))
    return {"layers": layers, "fc_w": fc_w, "fc_b": fc_b}


# ------------------------------- full forward -------------------------------
@partial(jax.jit, static_argnames=("output_dim",))
def gru_net_forward(x, h0, prepared, *, output_dim):
    """x: (B, T, input_dim) batch_first, h0: (n_layers, B, H).

    Returns (out, h) like the PyTorch module: out (B, output_dim),
    h (n_layers, B, H).
    """
    B, T, D = x.shape
    n_layers, _, H = h0.shape
    B_pad = _round_up(B, 8)                      # f32 sublane count
    G_pad = prepared["layers"][0]["w_hh"].shape[-1]
    O_pad = prepared["fc_w"].shape[-1]

    # The only per-call layout work: tiny transpose/pad of x and h0. The
    # cost_estimate below lets XLA overlap these with the custom call.
    x_tbd = jnp.transpose(x, (1, 0, 2))                      # (T, B, D)
    x_tbd = jnp.pad(x_tbd, ((0, 0), (0, B_pad - B), (0, 0)))
    x2d = x_tbd.reshape(T * B_pad, D)                        # (T*B_pad, D)
    h0_pad = jnp.pad(h0, ((0, 0), (0, B_pad - B), (0, 0)))   # (L, B_pad, H)

    flat = []
    for p in prepared["layers"]:
        flat += [p["w_ih"], p["w_hh"], p["b_gi"], p["b_hn"]]

    # Advisory cost estimate.
    flops = 0
    for p in prepared["layers"]:
        d_in = p["w_ih"].shape[0]
        flops += 2 * T * B_pad * d_in * 3 * H    # hoisted input projection
        flops += 2 * T * B_pad * H * 3 * H       # recurrent path
    flops += 2 * B_pad * H * O_pad               # fc head
    transcendentals = n_layers * T * B_pad * 3 * H
    bytes_accessed = int(
        x2d.size * 4 + h0_pad.size * 4
        + sum(int(a.size) * a.dtype.itemsize for a in flat)
        + int(prepared["fc_w"].size) * 2 + int(prepared["fc_b"].size) * 4
        + B_pad * O_pad * 4 + n_layers * B_pad * H * 4)

    kernel = make_fused_kernel(n_layers, T, B_pad, H, G_pad)
    out_pad, h_pad = pl.pallas_call(
        kernel,
        out_shape=(
            jax.ShapeDtypeStruct((B_pad, O_pad), jnp.float32),
            jax.ShapeDtypeStruct((n_layers, B_pad, H), jnp.float32),
        ),
        scratch_shapes=[
            pltpu.VMEM((T * B_pad, G_pad), jnp.float32),  # hoisted gi
            pltpu.VMEM((T * B_pad, H), jnp.float32),      # inter-layer seq
        ],
        compiler_params=pltpu.CompilerParams(
            vmem_limit_bytes=32 * 1024 * 1024),
        cost_estimate=pl.CostEstimate(flops=flops,
                                      transcendentals=transcendentals,
                                      bytes_accessed=bytes_accessed),
    )(x2d, h0_pad, *flat, prepared["fc_w"], prepared["fc_b"])

    return out_pad[:B, :output_dim], h_pad[:, :B, :]


# ------------------------------ parameter init ------------------------------
def init_params(key, input_dim, hidden_dim, output_dim, n_layers):
    """PyTorch-style U(-1/sqrt(H), 1/sqrt(H)) init, deterministic."""
    bound = 1.0 / (hidden_dim ** 0.5)
    layers = []
    for layer in range(n_layers):
        d_in = input_dim if layer == 0 else hidden_dim
        key, k1, k2, k3, k4 = jax.random.split(key, 5)
        layers.append({
            # stored pre-transposed: (D, 3H) / (H, 3H), gate order (r, z, n)
            "w_ih_t": jax.random.uniform(k1, (d_in, 3 * hidden_dim),
                                         jnp.float32, -bound, bound),
            "w_hh_t": jax.random.uniform(k2, (hidden_dim, 3 * hidden_dim),
                                         jnp.float32, -bound, bound),
            "b_ih": jax.random.uniform(k3, (1, 3 * hidden_dim),
                                       jnp.float32, -bound, bound),
            "b_hh": jax.random.uniform(k4, (1, 3 * hidden_dim),
                                       jnp.float32, -bound, bound),
        })
    key, k5, k6 = jax.random.split(key, 3)
    fc_bound = 1.0 / (hidden_dim ** 0.5)
    return {
        "gru_layers": layers,
        "fc_w_t": jax.random.uniform(k5, (hidden_dim, output_dim),
                                     jnp.float32, -fc_bound, fc_bound),
        "fc_b": jax.random.uniform(k6, (1, output_dim),
                                   jnp.float32, -fc_bound, fc_bound),
    }


# ------------------------------ pure-JAX reference ---------------------------
def _ref_forward(x, h0, params, mxu_dtype=jnp.bfloat16):
    """Reference mirroring the kernel's numerics: bf16 MXU operands,
    f32 accumulation, f32 gate math (PyTorch GRU formula)."""
    B, T, _ = x.shape
    layer_in = x
    h_fin = []
    for li, p in enumerate(params["gru_layers"]):
        h = h0[li]
        H = h.shape[-1]
        w_ih = p["w_ih_t"].astype(mxu_dtype)
        w_hh = p["w_hh_t"].astype(mxu_dtype)
        outs = []
        for t in range(T):
            xt = layer_in[:, t]
            gi = jnp.dot(xt.astype(mxu_dtype), w_ih,
                         preferred_element_type=jnp.float32) + p["b_ih"]
            gh = jnp.dot(h.astype(mxu_dtype), w_hh,
                         preferred_element_type=jnp.float32) + p["b_hh"]
            r = jax.nn.sigmoid(gi[:, :H] + gh[:, :H])
            z = jax.nn.sigmoid(gi[:, H:2 * H] + gh[:, H:2 * H])
            n = jnp.tanh(gi[:, 2 * H:] + r * gh[:, 2 * H:])
            h = (1.0 - z) * n + z * h
            outs.append(h)
        layer_in = jnp.stack(outs, axis=1)
        h_fin.append(h)
    out = jnp.dot(jnp.maximum(layer_in[:, -1], 0.0).astype(mxu_dtype),
                  params["fc_w_t"].astype(mxu_dtype),
                  preferred_element_type=jnp.float32) + params["fc_b"]
    return out, jnp.stack(h_fin, axis=0)


if __name__ == "__main__":
    # Small shapes consistent with the module's forward:
    batch, seq_len = 2, 8
    input_dim, hidden_dim, output_dim, n_layers = 16, 32, 4, 2

    key = jax.random.PRNGKey(0)
    kx, kp = jax.random.split(key)
    x = jax.random.normal(kx, (batch, seq_len, input_dim), jnp.float32)
    h0 = jnp.zeros((n_layers, batch, hidden_dim), jnp.float32)  # init_hidden()

    params = init_params(kp, input_dim, hidden_dim, output_dim, n_layers)
    prepared = prepare_params(params)   # one-time packing, outside the jit

    out, h = gru_net_forward(x, h0, prepared, output_dim=output_dim)
    out = jax.block_until_ready(out)
    h = jax.block_until_ready(h)

    ref_out, ref_h = _ref_forward(x, h0, params)
    assert out.shape == (batch, output_dim)
    assert h.shape == (n_layers, batch, hidden_dim)
    assert jnp.allclose(out, ref_out, atol=1e-4, rtol=1e-4), (
        f"out max abs diff {jnp.max(jnp.abs(out - ref_out))}")
    assert jnp.allclose(h, ref_h, atol=1e-4, rtol=1e-4), (
        f"h max abs diff {jnp.max(jnp.abs(h - ref_h))}")

    print("KERNEL_OK")
</pallas_src>

<mosaic_0001>
module attributes {stable_mosaic.version = 11 : i64} {
  func.func @kernel(%arg0: memref<64x16xf32, #tpu.memory_space<vmem>>, %arg1: memref<2x8x32xf32, #tpu.memory_space<vmem>>, %arg2: memref<16x128xbf16, #tpu.memory_space<vmem>>, %arg3: memref<32x128xbf16, #tpu.memory_space<vmem>>, %arg4: memref<1x128xf32, #tpu.memory_space<vmem>>, %arg5: memref<1x32xf32, #tpu.memory_space<vmem>>, %arg6: memref<32x128xbf16, #tpu.memory_space<vmem>>, %arg7: memref<32x128xbf16, #tpu.memory_space<vmem>>, %arg8: memref<1x128xf32, #tpu.memory_space<vmem>>, %arg9: memref<1x32xf32, #tpu.memory_space<vmem>>, %arg10: memref<32x128xbf16, #tpu.memory_space<vmem>>, %arg11: memref<1x128xf32, #tpu.memory_space<vmem>>, %arg12: memref<8x128xf32, #tpu.memory_space<vmem>>, %arg13: memref<2x8x32xf32, #tpu.memory_space<vmem>>, %arg14: memref<64x128xf32, #tpu.memory_space<vmem>>, %arg15: memref<64x32xf32, #tpu.memory_space<vmem>>) attributes {dimension_semantics = [], scalar_prefetch = 0 : i64, scratch_operands = 2 : i64, tpu.core_type = #tpu.core_type<tc>} {
    %c0 = arith.constant 0 : index
    %c0_0 = arith.constant 0 : index
    %0 = vector.load %arg0[%c0, %c0_0] : memref<64x16xf32, #tpu.memory_space<vmem>>, vector<64x16xf32>
    %1 = arith.truncf %0 : vector<64x16xf32> to vector<64x16xbf16>
    %c0_1 = arith.constant 0 : index
    %c0_2 = arith.constant 0 : index
    %2 = vector.load %arg2[%c0_1, %c0_2] : memref<16x128xbf16, #tpu.memory_space<vmem>>, vector<16x128xbf16>
    %cst = arith.constant dense<0.000000e+00> : vector<64x128xf32>
    %3 = tpu.matmul %1, %2, %cst {dimension_numbers = #tpu.dot_dimension_numbers<[1], [0], [0], [1], [0, 0, 1, 1], [], []>} : vector<64x16xbf16>, vector<16x128xbf16>, vector<64x128xf32> -> vector<64x128xf32>
    %c0_3 = arith.constant 0 : index
    %c0_4 = arith.constant 0 : index
    %4 = vector.load %arg4[%c0_3, %c0_4] : memref<1x128xf32, #tpu.memory_space<vmem>>, vector<1x128xf32>
    %5 = vector.broadcast %4 : vector<1x128xf32> to vector<64x128xf32>
    %6 = arith.addf %3, %5 : vector<64x128xf32>
    %c0_5 = arith.constant 0 : index
    %c0_6 = arith.constant 0 : index
    %7 = vector.load %arg14[%c0_5, %c0_6] : memref<64x128xf32, #tpu.memory_space<vmem>>, vector<64x128xf32>
    tpu.vector_store %arg14[%c0_5, %c0_6], %6 {strides = array<i32>} : memref<64x128xf32, #tpu.memory_space<vmem>>, vector<64x128xf32>,
    %c0_7 = arith.constant 0 : index
    %c0_8 = arith.constant 0 : index
    %8 = vector.load %arg5[%c0_7, %c0_8] : memref<1x32xf32, #tpu.memory_space<vmem>>, vector<1x32xf32>
    %9 = vector.shape_cast %8 : vector<1x32xf32> to vector<1x32xf32>
    %10 = vector.broadcast %9 : vector<1x32xf32> to vector<8x32xf32>
    %c0_9 = arith.constant 0 : index
    %c0_10 = arith.constant 0 : index
    %c0_11 = arith.constant 0 : index
    %11 = vector.load %arg1[%c0_9, %c0_10, %c0_11] : memref<2x8x32xf32, #tpu.memory_space<vmem>>, vector<1x8x32xf32>
    %12 = vector.shape_cast %11 : vector<1x8x32xf32> to vector<8x32xf32>
    %c0_i32 = arith.constant 0 : i32
    %c8_i32 = arith.constant 8 : i32
    %13 = arith.muli %c0_i32, %c8_i32 : i32
    %14 = tpu.assume_multiple %13, 8 : i32
    %15 = arith.index_cast %14 : i32 to index
    %c0_12 = arith.constant 0 : index
    %16 = vector.load %arg14[%15, %c0_12] : memref<64x128xf32, #tpu.memory_space<vmem>>, vector<8x128xf32>
    %17 = arith.truncf %12 : vector<8x32xf32> to vector<8x32xbf16>
    %c0_13 = arith.constant 0 : index
    %c0_14 = arith.constant 0 : index
    %18 = vector.load %arg3[%c0_13, %c0_14] : memref<32x128xbf16, #tpu.memory_space<vmem>>, vector<32x128xbf16>
    %cst_15 = arith.constant dense<0.000000e+00> : vector<8x128xf32>
    %19 = tpu.matmul %17, %18, %cst_15 {dimension_numbers = #tpu.dot_dimension_numbers<[1], [0], [0], [1], [0, 0, 1, 1], [], []>} : vector<8x32xbf16>, vector<32x128xbf16>, vector<8x128xf32> -> vector<8x128xf32>
    %20 = vector.extract_strided_slice %16 {offsets = [0, 0], sizes = [8, 64], strides = [1, 1]} : vector<8x128xf32> to vector<8x64xf32>
    %21 = vector.extract_strided_slice %19 {offsets = [0, 0], sizes = [8, 64], strides = [1, 1]} : vector<8x128xf32> to vector<8x64xf32>
    %22 = arith.addf %20, %21 : vector<8x64xf32>
    %23 = arith.negf %22 : vector<8x64xf32>
    %24 = math.exp %23 : vector<8x64xf32>
    %cst_16 = arith.constant 1.000000e+00 : f32
    %25 = vector.broadcast %cst_16 : f32 to vector<8x64xf32>
    %26 = arith.addf %25, %24 : vector<8x64xf32>
    %27 = arith.divf %25, %26 : vector<8x64xf32>
    %28 = vector.extract_strided_slice %27 {offsets = [0, 0], sizes = [8, 32], strides = [1, 1]} : vector<8x64xf32> to vector<8x32xf32>
    %29 = vector.extract_strided_slice %27 {offsets = [0, 32], sizes = [8, 32], strides = [1, 1]} : vector<8x64xf32> to vector<8x32xf32>
    %30 = vector.extract_strided_slice %16 {offsets = [0, 64], sizes = [8, 32], strides = [1, 1]} : vector<8x128xf32> to vector<8x32xf32>
    %31 = vector.extract_strided_slice %19 {offsets = [0, 64], sizes = [8, 32], strides = [1, 1]} : vector<8x128xf32> to vector<8x32xf32>
    %32 = arith.addf %31, %10 : vector<8x32xf32>
    %33 = arith.mulf %28, %32 : vector<8x32xf32>
    %34 = arith.addf %30, %33 : vector<8x32xf32>
    %35 = math.tanh %34 : vector<8x32xf32>
    %36 = arith.subf %12, %35 : vector<8x32xf32>
    %37 = arith.mulf %29, %36 : vector<8x32xf32>
    %38 = arith.addf %35, %37 : vector<8x32xf32>
    %39 = arith.index_cast %14 : i32 to index
    %c0_17 = arith.constant 0 : index
    %40 = vector.load %arg15[%39, %c0_17] : memref<64x32xf32, #tpu.memory_space<vmem>>, vector<8x32xf32>
    tpu.vector_store %arg15[%39, %c0_17], %38 {strides = array<i32>} : memref<64x32xf32, #tpu.memory_space<vmem>>, vector<8x32xf32>,
    %c1_i32 = arith.constant 1 : i32
    %c8_i32_18 = arith.constant 8 : i32
    %41 = arith.muli %c1_i32, %c8_i32_18 : i32
    %42 = tpu.assume_multiple %41, 8 : i32
    %43 = arith.index_cast %42 : i32 to index
    %c0_19 = arith.constant 0 : index
    %44 = vector.load %arg14[%43, %c0_19] : memref<64x128xf32, #tpu.memory_space<vmem>>, vector<8x128xf32>
    %45 = arith.truncf %38 : vector<8x32xf32> to vector<8x32xbf16>
    %c0_20 = arith.constant 0 : index
    %c0_21 = arith.constant 0 : index
    %46 = vector.load %arg3[%c0_20, %c0_21] : memref<32x128xbf16, #tpu.memory_space<vmem>>, vector<32x128xbf16>
    %cst_22 = arith.constant dense<0.000000e+00> : vector<8x128xf32>
    %47 = tpu.matmul %45, %46, %cst_22 {dimension_numbers = #tpu.dot_dimension_numbers<[1], [0], [0], [1], [0, 0, 1, 1], [], []>} : vector<8x32xbf16>, vector<32x128xbf16>, vector<8x128xf32> -> vector<8x128xf32>
    %48 = vector.extract_strided_slice %44 {offsets = [0, 0], sizes = [8, 64], strides = [1, 1]} : vector<8x128xf32> to vector<8x64xf32>
    %49 = vector.extract_strided_slice %47 {offsets = [0, 0], sizes = [8, 64], strides = [1, 1]} : vector<8x128xf32> to vector<8x64xf32>
    %50 = arith.addf %48, %49 : vector<8x64xf32>
    %51 = arith.negf %50 : vector<8x64xf32>
    %52 = math.exp %51 : vector<8x64xf32>
    %cst_23 = arith.constant 1.000000e+00 : f32
    %53 = vector.broadcast %cst_23 : f32 to vector<8x64xf32>
    %54 = arith.addf %53, %52 : vector<8x64xf32>
    %55 = arith.divf %53, %54 : vector<8x64xf32>
    %56 = vector.extract_strided_slice %55 {offsets = [0, 0], sizes = [8, 32], strides = [1, 1]} : vector<8x64xf32> to vector<8x32xf32>
    %57 = vector.extract_strided_slice %55 {offsets = [0, 32], sizes = [8, 32], strides = [1, 1]} : vector<8x64xf32> to vector<8x32xf32>
    %58 = vector.extract_strided_slice %44 {offsets = [0, 64], sizes = [8, 32], strides = [1, 1]} : vector<8x128xf32> to vector<8x32xf32>
    %59 = vector.extract_strided_slice %47 {offsets = [0, 64], sizes = [8, 32], strides = [1, 1]} : vector<8x128xf32> to vector<8x32xf32>
    %60 = arith.addf %59, %10 : vector<8x32xf32>
    %61 = arith.mulf %56, %60 : vector<8x32xf32>
    %62 = arith.addf %58, %61 : vector<8x32xf32>
    %63 = math.tanh %62 : vector<8x32xf32>
    %64 = arith.subf %38, %63 : vector<8x32xf32>
    %65 = arith.mulf %57, %64 : vector<8x32xf32>
    %66 = arith.addf %63, %65 : vector<8x32xf32>
    %67 = arith.index_cast %42 : i32 to index
    %c0_24 = arith.constant 0 : index
    %68 = vector.load %arg15[%67, %c0_24] : memref<64x32xf32, #tpu.memory_space<vmem>>, vector<8x32xf32>
    tpu.vector_store %arg15[%67, %c0_24], %66 {strides = array<i32>} : memref<64x32xf32, #tpu.memory_space<vmem>>, vector<8x32xf32>,
    %c2_i32 = arith.constant 2 : i32
    %c8_i32_25 = arith.constant 8 : i32
    %69 = arith.muli %c2_i32, %c8_i32_25 : i32
    %70 = tpu.assume_multiple %69, 8 : i32
    %71 = arith.index_cast %70 : i32 to index
    %c0_26 = arith.constant 0 : index
    %72 = vector.load %arg14[%71, %c0_26] : memref<64x128xf32, #tpu.memory_space<vmem>>, vector<8x128xf32>
    %73 = arith.truncf %66 : vector<8x32xf32> to vector<8x32xbf16>
    %c0_27 = arith.constant 0 : index
    %c0_28 = arith.constant 0 : index
    %74 = vector.load %arg3[%c0_27, %c0_28] : memref<32x128xbf16, #tpu.memory_space<vmem>>, vector<32x128xbf16>
    %cst_29 = arith.constant dense<0.000000e+00> : vector<8x128xf32>
    %75 = tpu.matmul %73, %74, %cst_29 {dimension_numbers = #tpu.dot_dimension_numbers<[1], [0], [0], [1], [0, 0, 1, 1], [], []>} : vector<8x32xbf16>, vector<32x128xbf16>, vector<8x128xf32> -> vector<8x128xf32>
    %76 = vector.extract_strided_slice %72 {offsets = [0, 0], sizes = [8, 64], strides = [1, 1]} : vector<8x128xf32> to vector<8x64xf32>
    %77 = vector.extract_strided_slice %75 {offsets = [0, 0], sizes = [8, 64], strides = [1, 1]} : vector<8x128xf32> to vector<8x64xf32>
    %78 = arith.addf %76, %77 : vector<8x64xf32>
    %79 = arith.negf %78 : vector<8x64xf32>
    %80 = math.exp %79 : vector<8x64xf32>
    %cst_30 = arith.constant 1.000000e+00 : f32
    %81 = vector.broadcast %cst_30 : f32 to vector<8x64xf32>
    %82 = arith.addf %81, %80 : vector<8x64xf32>
    %83 = arith.divf %81, %82 : vector<8x64xf32>
    %84 = vector.extract_strided_slice %83 {offsets = [0, 0], sizes = [8, 32], strides = [1, 1]} : vector<8x64xf32> to vector<8x32xf32>
    %85 = vector.extract_strided_slice %83 {offsets = [0, 32], sizes = [8, 32], strides = [1, 1]} : vector<8x64xf32> to vector<8x32xf32>
    %86 = vector.extract_strided_slice %72 {offsets = [0, 64], sizes = [8, 32], strides = [1, 1]} : vector<8x128xf32> to vector<8x32xf32>
    %87 = vector.extract_strided_slice %75 {offsets = [0, 64], sizes = [8, 32], strides = [1, 1]} : vector<8x128xf32> to vector<8x32xf32>
    %88 = arith.addf %87, %10 : vector<8x32xf32>
    %89 = arith.mulf %84, %88 : vector<8x32xf32>
    %90 = arith.addf %86, %89 : vector<8x32xf32>
    %91 = math.tanh %90 : vector<8x32xf32>
    %92 = arith.subf %66, %91 : vector<8x32xf32>
    %93 = arith.mulf %85, %92 : vector<8x32xf32>
    %94 = arith.addf %91, %93 : vector<8x32xf32>
    %95 = arith.index_cast %70 : i32 to index
    %c0_31 = arith.constant 0 : index
    %96 = vector.load %arg15[%95, %c0_31] : memref<64x32xf32, #tpu.memory_space<vmem>>, vector<8x32xf32>
    tpu.vector_store %arg15[%95, %c0_31], %94 {strides = array<i32>} : memref<64x32xf32, #tpu.memory_space<vmem>>, vector<8x32xf32>,
    %c3_i32 = arith.constant 3 : i32
    %c8_i32_32 = arith.constant 8 : i32
    %97 = arith.muli %c3_i32, %c8_i32_32 : i32
    %98 = tpu.assume_multiple %97, 8 : i32
    %99 = arith.index_cast %98 : i32 to index
    %c0_33 = arith.constant 0 : index
    %100 = vector.load %arg14[%99, %c0_33] : memref<64x128xf32, #tpu.memory_space<vmem>>, vector<8x128xf32>
    %101 = arith.truncf %94 : vector<8x32xf32> to vector<8x32xbf16>
    %c0_34 = arith.constant 0 : index
    %c0_35 = arith.constant 0 : index
    %102 = vector.load %arg3[%c0_34, %c0_35] : memref<32x128xbf16, #tpu.memory_space<vmem>>, vector<32x128xbf16>
    %cst_36 = arith.constant dense<0.000000e+00> : vector<8x128xf32>
    %103 = tpu.matmul %101, %102, %cst_36 {dimension_numbers = #tpu.dot_dimension_numbers<[1], [0], [0], [1], [0, 0, 1, 1], [], []>} : vector<8x32xbf16>, vector<32x128xbf16>, vector<8x128xf32> -> vector<8x128xf32>
    %104 = vector.extract_strided_slice %100 {offsets = [0, 0], sizes = [8, 64], strides = [1, 1]} : vector<8x128xf32> to vector<8x64xf32>
    %105 = vector.extract_strided_slice %103 {offsets = [0, 0], sizes = [8, 64], strides = [1, 1]} : vector<8x128xf32> to vector<8x64xf32>
    %106 = arith.addf %104, %105 : vector<8x64xf32>
    %107 = arith.negf %106 : vector<8x64xf32>
    %108 = math.exp %107 : vector<8x64xf32>
    %cst_37 = arith.constant 1.000000e+00 : f32
    %109 = vector.broadcast %cst_37 : f32 to vector<8x64xf32>
    %110 = arith.addf %109, %108 : vector<8x64xf32>
    %111 = arith.divf %109, %110 : vector<8x64xf32>
    %112 = vector.extract_strided_slice %111 {offsets = [0, 0], sizes = [8, 32], strides = [1, 1]} : vector<8x64xf32> to vector<8x32xf32>
    %113 = vector.extract_strided_slice %111 {offsets = [0, 32], sizes = [8, 32], strides = [1, 1]} : vector<8x64xf32> to vector<8x32xf32>
    %114 = vector.extract_strided_slice %100 {offsets = [0, 64], sizes = [8, 32], strides = [1, 1]} : vector<8x128xf32> to vector<8x32xf32>
    %115 = vector.extract_strided_slice %103 {offsets = [0, 64], sizes = [8, 32], strides = [1, 1]} : vector<8x128xf32> to vector<8x32xf32>
    %116 = arith.addf %115, %10 : vector<8x32xf32>
    %117 = arith.mulf %112, %116 : vector<8x32xf32>
    %118 = arith.addf %114, %117 : vector<8x32xf32>
    %119 = math.tanh %118 : vector<8x32xf32>
    %120 = arith.subf %94, %119 : vector<8x32xf32>
    %121 = arith.mulf %113, %120 : vector<8x32xf32>
    %122 = arith.addf %119, %121 : vector<8x32xf32>
    %123 = arith.index_cast %98 : i32 to index
    %c0_38 = arith.constant 0 : index
    %124 = vector.load %arg15[%123, %c0_38] : memref<64x32xf32, #tpu.memory_space<vmem>>, vector<8x32xf32>
    tpu.vector_store %arg15[%123, %c0_38], %122 {strides = array<i32>} : memref<64x32xf32, #tpu.memory_space<vmem>>, vector<8x32xf32>,
    %c4_i32 = arith.constant 4 : i32
    %c8_i32_39 = arith.constant 8 : i32
    %125 = arith.muli %c4_i32, %c8_i32_39 : i32
    %126 = tpu.assume_multiple %125, 8 : i32
    %127 = arith.index_cast %126 : i32 to index
    %c0_40 = arith.constant 0 : index
    %128 = vector.load %arg14[%127, %c0_40] : memref<64x128xf32, #tpu.memory_space<vmem>>, vector<8x128xf32>
    %129 = arith.truncf %122 : vector<8x32xf32> to vector<8x32xbf16>
    %c0_41 = arith.constant 0 : index
    %c0_42 = arith.constant 0 : index
    %130 = vector.load %arg3[%c0_41, %c0_42] : memref<32x128xbf16, #tpu.memory_space<vmem>>, vector<32x128xbf16>
    %cst_43 = arith.constant dense<0.000000e+00> : vector<8x128xf32>
    %131 = tpu.matmul %129, %130, %cst_43 {dimension_numbers = #tpu.dot_dimension_numbers<[1], [0], [0], [1], [0, 0, 1, 1], [], []>} : vector<8x32xbf16>, vector<32x128xbf16>, vector<8x128xf32> -> vector<8x128xf32>
    %132 = vector.extract_strided_slice %128 {offsets = [0, 0], sizes = [8, 64], strides = [1, 1]} : vector<8x128xf32> to vector<8x64xf32>
    %133 = vector.extract_strided_slice %131 {offsets = [0, 0], sizes = [8, 64], strides = [1, 1]} : vector<8x128xf32> to vector<8x64xf32>
    %134 = arith.addf %132, %133 : vector<8x64xf32>
    %135 = arith.negf %134 : vector<8x64xf32>
    %136 = math.exp %135 : vector<8x64xf32>
    %cst_44 = arith.constant 1.000000e+00 : f32
    %137 = vector.broadcast %cst_44 : f32 to vector<8x64xf32>
    %138 = arith.addf %137, %136 : vector<8x64xf32>
    %139 = arith.divf %137, %138 : vector<8x64xf32>
    %140 = vector.extract_strided_slice %139 {offsets = [0, 0], sizes = [8, 32], strides = [1, 1]} : vector<8x64xf32> to vector<8x32xf32>
    %141 = vector.extract_strided_slice %139 {offsets = [0, 32], sizes = [8, 32], strides = [1, 1]} : vector<8x64xf32> to vector<8x32xf32>
    %142 = vector.extract_strided_slice %128 {offsets = [0, 64], sizes = [8, 32], strides = [1, 1]} : vector<8x128xf32> to vector<8x32xf32>
    %143 = vector.extract_strided_slice %131 {offsets = [0, 64], sizes = [8, 32], strides = [1, 1]} : vector<8x128xf32> to vector<8x32xf32>
    %144 = arith.addf %143, %10 : vector<8x32xf32>
    %145 = arith.mulf %140, %144 : vector<8x32xf32>
    %146 = arith.addf %142, %145 : vector<8x32xf32>
    %147 = math.tanh %146 : vector<8x32xf32>
    %148 = arith.subf %122, %147 : vector<8x32xf32>
    %149 = arith.mulf %141, %148 : vector<8x32xf32>
    %150 = arith.addf %147, %149 : vector<8x32xf32>
    %151 = arith.index_cast %126 : i32 to index
    %c0_45 = arith.constant 0 : index
    %152 = vector.load %arg15[%151, %c0_45] : memref<64x32xf32, #tpu.memory_space<vmem>>, vector<8x32xf32>
    tpu.vector_store %arg15[%151, %c0_45], %150 {strides = array<i32>} : memref<64x32xf32, #tpu.memory_space<vmem>>, vector<8x32xf32>,
    %c5_i32 = arith.constant 5 : i32
    %c8_i32_46 = arith.constant 8 : i32
    %153 = arith.muli %c5_i32, %c8_i32_46 : i32
    %154 = tpu.assume_multiple %153, 8 : i32
    %155 = arith.index_cast %154 : i32 to index
    %c0_47 = arith.constant 0 : index
    %156 = vector.load %arg14[%155, %c0_47] : memref<64x128xf32, #tpu.memory_space<vmem>>, vector<8x128xf32>
    %157 = arith.truncf %150 : vector<8x32xf32> to vector<8x32xbf16>
    %c0_48 = arith.constant 0 : index
    %c0_49 = arith.constant 0 : index
    %158 = vector.load %arg3[%c0_48, %c0_49] : memref<32x128xbf16, #tpu.memory_space<vmem>>, vector<32x128xbf16>
    %cst_50 = arith.constant dense<0.000000e+00> : vector<8x128xf32>
    %159 = tpu.matmul %157, %158, %cst_50 {dimension_numbers = #tpu.dot_dimension_numbers<[1], [0], [0], [1], [0, 0, 1, 1], [], []>} : vector<8x32xbf16>, vector<32x128xbf16>, vector<8x128xf32> -> vector<8x128xf32>
    %160 = vector.extract_strided_slice %156 {offsets = [0, 0], sizes = [8, 64], strides = [1, 1]} : vector<8x128xf32> to vector<8x64xf32>
    %161 = vector.extract_strided_slice %159 {offsets = [0, 0], sizes = [8, 64], strides = [1, 1]} : vector<8x128xf32> to vector<8x64xf32>
    %162 = arith.addf %160, %161 : vector<8x64xf32>
    %163 = arith.negf %162 : vector<8x64xf32>
    %164 = math.exp %163 : vector<8x64xf32>
    %cst_51 = arith.constant 1.000000e+00 : f32
    %165 = vector.broadcast %cst_51 : f32 to vector<8x64xf32>
    %166 = arith.addf %165, %164 : vector<8x64xf32>
    %167 = arith.divf %165, %166 : vector<8x64xf32>
    %168 = vector.extract_strided_slice %167 {offsets = [0, 0], sizes = [8, 32], strides = [1, 1]} : vector<8x64xf32> to vector<8x32xf32>
    %169 = vector.extract_strided_slice %167 {offsets = [0, 32], sizes = [8, 32], strides = [1, 1]} : vector<8x64xf32> to vector<8x32xf32>
    %170 = vector.extract_strided_slice %156 {offsets = [0, 64], sizes = [8, 32], strides = [1, 1]} : vector<8x128xf32> to vector<8x32xf32>
    %171 = vector.extract_strided_slice %159 {offsets = [0, 64], sizes = [8, 32], strides = [1, 1]} : vector<8x128xf32> to vector<8x32xf32>
    %172 = arith.addf %171, %10 : vector<8x32xf32>
    %173 = arith.mulf %168, %172 : vector<8x32xf32>
    %174 = arith.addf %170, %173 : vector<8x32xf32>
    %175 = math.tanh %174 : vector<8x32xf32>
    %176 = arith.subf %150, %175 : vector<8x32xf32>
    %177 = arith.mulf %169, %176 : vector<8x32xf32>
    %178 = arith.addf %175, %177 : vector<8x32xf32>
    %179 = arith.index_cast %154 : i32 to index
    %c0_52 = arith.constant 0 : index
    %180 = vector.load %arg15[%179, %c0_52] : memref<64x32xf32, #tpu.memory_space<vmem>>, vector<8x32xf32>
    tpu.vector_store %arg15[%179, %c0_52], %178 {strides = array<i32>} : memref<64x32xf32, #tpu.memory_space<vmem>>, vector<8x32xf32>,
    %c6_i32 = arith.constant 6 : i32
    %c8_i32_53 = arith.constant 8 : i32
    %181 = arith.muli %c6_i32, %c8_i32_53 : i32
    %182 = tpu.assume_multiple %181, 8 : i32
    %183 = arith.index_cast %182 : i32 to index
    %c0_54 = arith.constant 0 : index
    %184 = vector.load %arg14[%183, %c0_54] : memref<64x128xf32, #tpu.memory_space<vmem>>, vector<8x128xf32>
    %185 = arith.truncf %178 : vector<8x32xf32> to vector<8x32xbf16>
    %c0_55 = arith.constant 0 : index
    %c0_56 = arith.constant 0 : index
    %186 = vector.load %arg3[%c0_55, %c0_56] : memref<32x128xbf16, #tpu.memory_space<vmem>>, vector<32x128xbf16>
    %cst_57 = arith.constant dense<0.000000e+00> : vector<8x128xf32>
    %187 = tpu.matmul %185, %186, %cst_57 {dimension_numbers = #tpu.dot_dimension_numbers<[1], [0], [0], [1], [0, 0, 1, 1], [], []>} : vector<8x32xbf16>, vector<32x128xbf16>, vector<8x128xf32> -> vector<8x128xf32>
    %188 = vector.extract_strided_slice %184 {offsets = [0, 0], sizes = [8, 64], strides = [1, 1]} : vector<8x128xf32> to vector<8x64xf32>
    %189 = vector.extract_strided_slice %187 {offsets = [0, 0], sizes = [8, 64], strides = [1, 1]} : vector<8x128xf32> to vector<8x64xf32>
    %190 = arith.addf %188, %189 : vector<8x64xf32>
    %191 = arith.negf %190 : vector<8x64xf32>
    %192 = math.exp %191 : vector<8x64xf32>
    %cst_58 = arith.constant 1.000000e+00 : f32
    %193 = vector.broadcast %cst_58 : f32 to vector<8x64xf32>
    %194 = arith.addf %193, %192 : vector<8x64xf32>
    %195 = arith.divf %193, %194 : vector<8x64xf32>
    %196 = vector.extract_strided_slice %195 {offsets = [0, 0], sizes = [8, 32], strides = [1, 1]} : vector<8x64xf32> to vector<8x32xf32>
    %197 = vector.extract_strided_slice %195 {offsets = [0, 32], sizes = [8, 32], strides = [1, 1]} : vector<8x64xf32> to vector<8x32xf32>
    %198 = vector.extract_strided_slice %184 {offsets = [0, 64], sizes = [8, 32], strides = [1, 1]} : vector<8x128xf32> to vector<8x32xf32>
    %199 = vector.extract_strided_slice %187 {offsets = [0, 64], sizes = [8, 32], strides = [1, 1]} : vector<8x128xf32> to vector<8x32xf32>
    %200 = arith.addf %199, %10 : vector<8x32xf32>
    %201 = arith.mulf %196, %200 : vector<8x32xf32>
    %202 = arith.addf %198, %201 : vector<8x32xf32>
    %203 = math.tanh %202 : vector<8x32xf32>
    %204 = arith.subf %178, %203 : vector<8x32xf32>
    %205 = arith.mulf %197, %204 : vector<8x32xf32>
    %206 = arith.addf %203, %205 : vector<8x32xf32>
    %207 = arith.index_cast %182 : i32 to index
    %c0_59 = arith.constant 0 : index
    %208 = vector.load %arg15[%207, %c0_59] : memref<64x32xf32, #tpu.memory_space<vmem>>, vector<8x32xf32>
    tpu.vector_store %arg15[%207, %c0_59], %206 {strides = array<i32>} : memref<64x32xf32, #tpu.memory_space<vmem>>, vector<8x32xf32>,
    %c7_i32 = arith.constant 7 : i32
    %c8_i32_60 = arith.constant 8 : i32
    %209 = arith.muli %c7_i32, %c8_i32_60 : i32
    %210 = tpu.assume_multiple %209, 8 : i32
    %211 = arith.index_cast %210 : i32 to index
    %c0_61 = arith.constant 0 : index
    %212 = vector.load %arg14[%211, %c0_61] : memref<64x128xf32, #tpu.memory_space<vmem>>, vector<8x128xf32>
    %213 = arith.truncf %206 : vector<8x32xf32> to vector<8x32xbf16>
    %c0_62 = arith.constant 0 : index
    %c0_63 = arith.constant 0 : index
    %214 = vector.load %arg3[%c0_62, %c0_63] : memref<32x128xbf16, #tpu.memory_space<vmem>>, vector<32x128xbf16>
    %cst_64 = arith.constant dense<0.000000e+00> : vector<8x128xf32>
    %215 = tpu.matmul %213, %214, %cst_64 {dimension_numbers = #tpu.dot_dimension_numbers<[1], [0], [0], [1], [0, 0, 1, 1], [], []>} : vector<8x32xbf16>, vector<32x128xbf16>, vector<8x128xf32> -> vector<8x128xf32>
    %216 = vector.extract_strided_slice %212 {offsets = [0, 0], sizes = [8, 64], strides = [1, 1]} : vector<8x128xf32> to vector<8x64xf32>
    %217 = vector.extract_strided_slice %215 {offsets = [0, 0], sizes = [8, 64], strides = [1, 1]} : vector<8x128xf32> to vector<8x64xf32>
    %218 = arith.addf %216, %217 : vector<8x64xf32>
    %219 = arith.negf %218 : vector<8x64xf32>
    %220 = math.exp %219 : vector<8x64xf32>
    %cst_65 = arith.constant 1.000000e+00 : f32
    %221 = vector.broadcast %cst_65 : f32 to vector<8x64xf32>
    %222 = arith.addf %221, %220 : vector<8x64xf32>
    %223 = arith.divf %221, %222 : vector<8x64xf32>
    %224 = vector.extract_strided_slice %223 {offsets = [0, 0], sizes = [8, 32], strides = [1, 1]} : vector<8x64xf32> to vector<8x32xf32>
    %225 = vector.extract_strided_slice %223 {offsets = [0, 32], sizes = [8, 32], strides = [1, 1]} : vector<8x64xf32> to vector<8x32xf32>
    %226 = vector.extract_strided_slice %212 {offsets = [0, 64], sizes = [8, 32], strides = [1, 1]} : vector<8x128xf32> to vector<8x32xf32>
    %227 = vector.extract_strided_slice %215 {offsets = [0, 64], sizes = [8, 32], strides = [1, 1]} : vector<8x128xf32> to vector<8x32xf32>
    %228 = arith.addf %227, %10 : vector<8x32xf32>
    %229 = arith.mulf %224, %228 : vector<8x32xf32>
    %230 = arith.addf %226, %229 : vector<8x32xf32>
    %231 = math.tanh %230 : vector<8x32xf32>
    %232 = arith.subf %206, %231 : vector<8x32xf32>
    %233 = arith.mulf %225, %232 : vector<8x32xf32>
    %234 = arith.addf %231, %233 : vector<8x32xf32>
    %235 = arith.index_cast %210 : i32 to index
    %c0_66 = arith.constant 0 : index
    %236 = vector.load %arg15[%235, %c0_66] : memref<64x32xf32, #tpu.memory_space<vmem>>, vector<8x32xf32>
    tpu.vector_store %arg15[%235, %c0_66], %234 {strides = array<i32>} : memref<64x32xf32, #tpu.memory_space<vmem>>, vector<8x32xf32>,
    %c8_i32_67 = arith.constant 8 : i32
    %c0_68 = arith.constant 0 : index
    %c0_69 = arith.constant 0 : index
    %c0_70 = arith.constant 0 : index
    %237 = vector.load %arg13[%c0_68, %c0_69, %c0_70] : memref<2x8x32xf32, #tpu.memory_space<vmem>>, vector<1x8x32xf32>
    %238 = vector.shape_cast %237 : vector<1x8x32xf32> to vector<8x32xf32>
    %239 = vector.shape_cast %234 : vector<8x32xf32> to vector<1x8x32xf32>
    tpu.vector_store %arg13[%c0_68, %c0_69, %c0_70], %239 {strides = array<i32>} : memref<2x8x32xf32, #tpu.memory_space<vmem>>, vector<1x8x32xf32>,
    %c0_71 = arith.constant 0 : index
    %c0_72 = arith.constant 0 : index
    %240 = vector.load %arg15[%c0_71, %c0_72] : memref<64x32xf32, #tpu.memory_space<vmem>>, vector<64x32xf32>
    %241 = arith.truncf %240 : vector<64x32xf32> to vector<64x32xbf16>
    %c0_73 = arith.constant 0 : index
    %c0_74 = arith.constant 0 : index
    %242 = vector.load %arg6[%c0_73, %c0_74] : memref<32x128xbf16, #tpu.memory_space<vmem>>, vector<32x128xbf16>
    %cst_75 = arith.constant dense<0.000000e+00> : vector<64x128xf32>
    %243 = tpu.matmul %241, %242, %cst_75 {dimension_numbers = #tpu.dot_dimension_numbers<[1], [0], [0], [1], [0, 0, 1, 1], [], []>} : vector<64x32xbf16>, vector<32x128xbf16>, vector<64x128xf32> -> vector<64x128xf32>
    %c0_76 = arith.constant 0 : index
    %c0_77 = arith.constant 0 : index
    %244 = vector.load %arg8[%c0_76, %c0_77] : memref<1x128xf32, #tpu.memory_space<vmem>>, vector<1x128xf32>
    %245 = vector.broadcast %244 : vector<1x128xf32> to vector<64x128xf32>
    %246 = arith.addf %243, %245 : vector<64x128xf32>
    %c0_78 = arith.constant 0 : index
    %c0_79 = arith.constant 0 : index
    %247 = vector.load %arg14[%c0_78, %c0_79] : memref<64x128xf32, #tpu.memory_space<vmem>>, vector<64x128xf32>
    tpu.vector_store %arg14[%c0_78, %c0_79], %246 {strides = array<i32>} : memref<64x128xf32, #tpu.memory_space<vmem>>, vector<64x128xf32>,
    %c0_80 = arith.constant 0 : index
    %c0_81 = arith.constant 0 : index
    %248 = vector.load %arg9[%c0_80, %c0_81] : memref<1x32xf32, #tpu.memory_space<vmem>>, vector<1x32xf32>
    %249 = vector.shape_cast %248 : vector<1x32xf32> to vector<1x32xf32>
    %250 = vector.broadcast %249 : vector<1x32xf32> to vector<8x32xf32>
    %c1 = arith.constant 1 : index
    %c0_82 = arith.constant 0 : index
    %c0_83 = arith.constant 0 : index
    %251 = vector.load %arg1[%c1, %c0_82, %c0_83] : memref<2x8x32xf32, #tpu.memory_space<vmem>>, vector<1x8x32xf32>
    %252 = vector.shape_cast %251 : vector<1x8x32xf32> to vector<8x32xf32>
    %c0_i32_84 = arith.constant 0 : i32
    %c8_i32_85 = arith.constant 8 : i32
    %253 = arith.muli %c0_i32_84, %c8_i32_85 : i32
    %254 = tpu.assume_multiple %253, 8 : i32
    %255 = arith.index_cast %254 : i32 to index
    %c0_86 = arith.constant 0 : index
    %256 = vector.load %arg14[%255, %c0_86] : memref<64x128xf32, #tpu.memory_space<vmem>>, vector<8x128xf32>
    %257 = arith.truncf %252 : vector<8x32xf32> to vector<8x32xbf16>
    %c0_87 = arith.constant 0 : index
    %c0_88 = arith.constant 0 : index
    %258 = vector.load %arg7[%c0_87, %c0_88] : memref<32x128xbf16, #tpu.memory_space<vmem>>, vector<32x128xbf16>
    %cst_89 = arith.constant dense<0.000000e+00> : vector<8x128xf32>
    %259 = tpu.matmul %257, %258, %cst_89 {dimension_numbers = #tpu.dot_dimension_numbers<[1], [0], [0], [1], [0, 0, 1, 1], [], []>} : vector<8x32xbf16>, vector<32x128xbf16>, vector<8x128xf32> -> vector<8x128xf32>
    %260 = vector.extract_strided_slice %256 {offsets = [0, 0], sizes = [8, 64], strides = [1, 1]} : vector<8x128xf32> to vector<8x64xf32>
    %261 = vector.extract_strided_slice %259 {offsets = [0, 0], sizes = [8, 64], strides = [1, 1]} : vector<8x128xf32> to vector<8x64xf32>
    %262 = arith.addf %260, %261 : vector<8x64xf32>
    %263 = arith.negf %262 : vector<8x64xf32>
    %264 = math.exp %263 : vector<8x64xf32>
    %cst_90 = arith.constant 1.000000e+00 : f32
    %265 = vector.broadcast %cst_90 : f32 to vector<8x64xf32>
    %266 = arith.addf %265, %264 : vector<8x64xf32>
    %267 = arith.divf %265, %266 : vector<8x64xf32>
    %268 = vector.extract_strided_slice %267 {offsets = [0, 0], sizes = [8, 32], strides = [1, 1]} : vector<8x64xf32> to vector<8x32xf32>
    %269 = vector.extract_strided_slice %267 {offsets = [0, 32], sizes = [8, 32], strides = [1, 1]} : vector<8x64xf32> to vector<8x32xf32>
    %270 = vector.extract_strided_slice %256 {offsets = [0, 64], sizes = [8, 32], strides = [1, 1]} : vector<8x128xf32> to vector<8x32xf32>
    %271 = vector.extract_strided_slice %259 {offsets = [0, 64], sizes = [8, 32], strides = [1, 1]} : vector<8x128xf32> to vector<8x32xf32>
    %272 = arith.addf %271, %250 : vector<8x32xf32>
    %273 = arith.mulf %268, %272 : vector<8x32xf32>
    %274 = arith.addf %270, %273 : vector<8x32xf32>
    %275 = math.tanh %274 : vector<8x32xf32>
    %276 = arith.subf %252, %275 : vector<8x32xf32>
    %277 = arith.mulf %269, %276 : vector<8x32xf32>
    %278 = arith.addf %275, %277 : vector<8x32xf32>
    %c1_i32_91 = arith.constant 1 : i32
    %c8_i32_92 = arith.constant 8 : i32
    %279 = arith.muli %c1_i32_91, %c8_i32_92 : i32
    %280 = tpu.assume_multiple %279, 8 : i32
    %281 = arith.index_cast %280 : i32 to index
    %c0_93 = arith.constant 0 : index
    %282 = vector.load %arg14[%281, %c0_93] : memref<64x128xf32, #tpu.memory_space<vmem>>, vector<8x128xf32>
    %283 = arith.truncf %278 : vector<8x32xf32> to vector<8x32xbf16>
    %c0_94 = arith.constant 0 : index
    %c0_95 = arith.constant 0 : index
    %284 = vector.load %arg7[%c0_94, %c0_95] : memref<32x128xbf16, #tpu.memory_space<vmem>>, vector<32x128xbf16>
    %cst_96 = arith.constant dense<0.000000e+00> : vector<8x128xf32>
    %285 = tpu.matmul %283, %284, %cst_96 {dimension_numbers = #tpu.dot_dimension_numbers<[1], [0], [0], [1], [0, 0, 1, 1], [], []>} : vector<8x32xbf16>, vector<32x128xbf16>, vector<8x128xf32> -> vector<8x128xf32>
    %286 = vector.extract_strided_slice %282 {offsets = [0, 0], sizes = [8, 64], strides = [1, 1]} : vector<8x128xf32> to vector<8x64xf32>
    %287 = vector.extract_strided_slice %285 {offsets = [0, 0], sizes = [8, 64], strides = [1, 1]} : vector<8x128xf32> to vector<8x64xf32>
    %288 = arith.addf %286, %287 : vector<8x64xf32>
    %289 = arith.negf %288 : vector<8x64xf32>
    %290 = math.exp %289 : vector<8x64xf32>
    %cst_97 = arith.constant 1.000000e+00 : f32
    %291 = vector.broadcast %cst_97 : f32 to vector<8x64xf32>
    %292 = arith.addf %291, %290 : vector<8x64xf32>
    %293 = arith.divf %291, %292 : vector<8x64xf32>
    %294 = vector.extract_strided_slice %293 {offsets = [0, 0], sizes = [8, 32], strides = [1, 1]} : vector<8x64xf32> to vector<8x32xf32>
    %295 = vector.extract_strided_slice %293 {offsets = [0, 32], sizes = [8, 32], strides = [1, 1]} : vector<8x64xf32> to vector<8x32xf32>
    %296 = vector.extract_strided_slice %282 {offsets = [0, 64], sizes = [8, 32], strides = [1, 1]} : vector<8x128xf32> to vector<8x32xf32>
    %297 = vector.extract_strided_slice %285 {offsets = [0, 64], sizes = [8, 32], strides = [1, 1]} : vector<8x128xf32> to vector<8x32xf32>
    %298 = arith.addf %297, %250 : vector<8x32xf32>
    %299 = arith.mulf %294, %298 : vector<8x32xf32>
    %300 = arith.addf %296, %299 : vector<8x32xf32>
    %301 = math.tanh %300 : vector<8x32xf32>
    %302 = arith.subf %278, %301 : vector<8x32xf32>
    %303 = arith.mulf %295, %302 : vector<8x32xf32>
    %304 = arith.addf %301, %303 : vector<8x32xf32>
    %c2_i32_98 = arith.constant 2 : i32
    %c8_i32_99 = arith.constant 8 : i32
    %305 = arith.muli %c2_i32_98, %c8_i32_99 : i32
    %306 = tpu.assume_multiple %305, 8 : i32
    %307 = arith.index_cast %306 : i32 to index
    %c0_100 = arith.constant 0 : index
    %308 = vector.load %arg14[%307, %c0_100] : memref<64x128xf32, #tpu.memory_space<vmem>>, vector<8x128xf32>
    %309 = arith.truncf %304 : vector<8x32xf32> to vector<8x32xbf16>
    %c0_101 = arith.constant 0 : index
    %c0_102 = arith.constant 0 : index
    %310 = vector.load %arg7[%c0_101, %c0_102] : memref<32x128xbf16, #tpu.memory_space<vmem>>, vector<32x128xbf16>
    %cst_103 = arith.constant dense<0.000000e+00> : vector<8x128xf32>
    %311 = tpu.matmul %309, %310, %cst_103 {dimension_numbers = #tpu.dot_dimension_numbers<[1], [0], [0], [1], [0, 0, 1, 1], [], []>} : vector<8x32xbf16>, vector<32x128xbf16>, vector<8x128xf32> -> vector<8x128xf32>
    %312 = vector.extract_strided_slice %308 {offsets = [0, 0], sizes = [8, 64], strides = [1, 1]} : vector<8x128xf32> to vector<8x64xf32>
    %313 = vector.extract_strided_slice %311 {offsets = [0, 0], sizes = [8, 64], strides = [1, 1]} : vector<8x128xf32> to vector<8x64xf32>
    %314 = arith.addf %312, %313 : vector<8x64xf32>
    %315 = arith.negf %314 : vector<8x64xf32>
    %316 = math.exp %315 : vector<8x64xf32>
    %cst_104 = arith.constant 1.000000e+00 : f32
    %317 = vector.broadcast %cst_104 : f32 to vector<8x64xf32>
    %318 = arith.addf %317, %316 : vector<8x64xf32>
    %319 = arith.divf %317, %318 : vector<8x64xf32>
    %320 = vector.extract_strided_slice %319 {offsets = [0, 0], sizes = [8, 32], strides = [1, 1]} : vector<8x64xf32> to vector<8x32xf32>
    %321 = vector.extract_strided_slice %319 {offsets = [0, 32], sizes = [8, 32], strides = [1, 1]} : vector<8x64xf32> to vector<8x32xf32>
    %322 = vector.extract_strided_slice %308 {offsets = [0, 64], sizes = [8, 32], strides = [1, 1]} : vector<8x128xf32> to vector<8x32xf32>
    %323 = vector.extract_strided_slice %311 {offsets = [0, 64], sizes = [8, 32], strides = [1, 1]} : vector<8x128xf32> to vector<8x32xf32>
    %324 = arith.addf %323, %250 : vector<8x32xf32>
    %325 = arith.mulf %320, %324 : vector<8x32xf32>
    %326 = arith.addf %322, %325 : vector<8x32xf32>
    %327 = math.tanh %326 : vector<8x32xf32>
    %328 = arith.subf %304, %327 : vector<8x32xf32>
    %329 = arith.mulf %321, %328 : vector<8x32xf32>
    %330 = arith.addf %327, %329 : vector<8x32xf32>
    %c3_i32_105 = arith.constant 3 : i32
    %c8_i32_106 = arith.constant 8 : i32
    %331 = arith.muli %c3_i32_105, %c8_i32_106 : i32
    %332 = tpu.assume_multiple %331, 8 : i32
    %333 = arith.index_cast %332 : i32 to index
    %c0_107 = arith.constant 0 : index
    %334 = vector.load %arg14[%333, %c0_107] : memref<64x128xf32, #tpu.memory_space<vmem>>, vector<8x128xf32>
    %335 = arith.truncf %330 : vector<8x32xf32> to vector<8x32xbf16>
    %c0_108 = arith.constant 0 : index
    %c0_109 = arith.constant 0 : index
    %336 = vector.load %arg7[%c0_108, %c0_109] : memref<32x128xbf16, #tpu.memory_space<vmem>>, vector<32x128xbf16>
    %cst_110 = arith.constant dense<0.000000e+00> : vector<8x128xf32>
    %337 = tpu.matmul %335, %336, %cst_110 {dimension_numbers = #tpu.dot_dimension_numbers<[1], [0], [0], [1], [0, 0, 1, 1], [], []>} : vector<8x32xbf16>, vector<32x128xbf16>, vector<8x128xf32> -> vector<8x128xf32>
    %338 = vector.extract_strided_slice %334 {offsets = [0, 0], sizes = [8, 64], strides = [1, 1]} : vector<8x128xf32> to vector<8x64xf32>
    %339 = vector.extract_strided_slice %337 {offsets = [0, 0], sizes = [8, 64], strides = [1, 1]} : vector<8x128xf32> to vector<8x64xf32>
    %340 = arith.addf %338, %339 : vector<8x64xf32>
    %341 = arith.negf %340 : vector<8x64xf32>
    %342 = math.exp %341 : vector<8x64xf32>
    %cst_111 = arith.constant 1.000000e+00 : f32
    %343 = vector.broadcast %cst_111 : f32 to vector<8x64xf32>
    %344 = arith.addf %343, %342 : vector<8x64xf32>
    %345 = arith.divf %343, %344 : vector<8x64xf32>
    %346 = vector.extract_strided_slice %345 {offsets = [0, 0], sizes = [8, 32], strides = [1, 1]} : vector<8x64xf32> to vector<8x32xf32>
    %347 = vector.extract_strided_slice %345 {offsets = [0, 32], sizes = [8, 32], strides = [1, 1]} : vector<8x64xf32> to vector<8x32xf32>
    %348 = vector.extract_strided_slice %334 {offsets = [0, 64], sizes = [8, 32], strides = [1, 1]} : vector<8x128xf32> to vector<8x32xf32>
    %349 = vector.extract_strided_slice %337 {offsets = [0, 64], sizes = [8, 32], strides = [1, 1]} : vector<8x128xf32> to vector<8x32xf32>
    %350 = arith.addf %349, %250 : vector<8x32xf32>
    %351 = arith.mulf %346, %350 : vector<8x32xf32>
    %352 = arith.addf %348, %351 : vector<8x32xf32>
    %353 = math.tanh %352 : vector<8x32xf32>
    %354 = arith.subf %330, %353 : vector<8x32xf32>
    %355 = arith.mulf %347, %354 : vector<8x32xf32>
    %356 = arith.addf %353, %355 : vector<8x32xf32>
    %c4_i32_112 = arith.constant 4 : i32
    %c8_i32_113 = arith.constant 8 : i32
    %357 = arith.muli %c4_i32_112, %c8_i32_113 : i32
    %358 = tpu.assume_multiple %357, 8 : i32
    %359 = arith.index_cast %358 : i32 to index
    %c0_114 = arith.constant 0 : index
    %360 = vector.load %arg14[%359, %c0_114] : memref<64x128xf32, #tpu.memory_space<vmem>>, vector<8x128xf32>
    %361 = arith.truncf %356 : vector<8x32xf32> to vector<8x32xbf16>
    %c0_115 = arith.constant 0 : index
    %c0_116 = arith.constant 0 : index
    %362 = vector.load %arg7[%c0_115, %c0_116] : memref<32x128xbf16, #tpu.memory_space<vmem>>, vector<32x128xbf16>
    %cst_117 = arith.constant dense<0.000000e+00> : vector<8x128xf32>
    %363 = tpu.matmul %361, %362, %cst_117 {dimension_numbers = #tpu.dot_dimension_numbers<[1], [0], [0], [1], [0, 0, 1, 1], [], []>} : vector<8x32xbf16>, vector<32x128xbf16>, vector<8x128xf32> -> vector<8x128xf32>
    %364 = vector.extract_strided_slice %360 {offsets = [0, 0], sizes = [8, 64], strides = [1, 1]} : vector<8x128xf32> to vector<8x64xf32>
    %365 = vector.extract_strided_slice %363 {offsets = [0, 0], sizes = [8, 64], strides = [1, 1]} : vector<8x128xf32> to vector<8x64xf32>
    %366 = arith.addf %364, %365 : vector<8x64xf32>
    %367 = arith.negf %366 : vector<8x64xf32>
    %368 = math.exp %367 : vector<8x64xf32>
    %cst_118 = arith.constant 1.000000e+00 : f32
    %369 = vector.broadcast %cst_118 : f32 to vector<8x64xf32>
    %370 = arith.addf %369, %368 : vector<8x64xf32>
    %371 = arith.divf %369, %370 : vector<8x64xf32>
    %372 = vector.extract_strided_slice %371 {offsets = [0, 0], sizes = [8, 32], strides = [1, 1]} : vector<8x64xf32> to vector<8x32xf32>
    %373 = vector.extract_strided_slice %371 {offsets = [0, 32], sizes = [8, 32], strides = [1, 1]} : vector<8x64xf32> to vector<8x32xf32>
    %374 = vector.extract_strided_slice %360 {offsets = [0, 64], sizes = [8, 32], strides = [1, 1]} : vector<8x128xf32> to vector<8x32xf32>
    %375 = vector.extract_strided_slice %363 {offsets = [0, 64], sizes = [8, 32], strides = [1, 1]} : vector<8x128xf32> to vector<8x32xf32>
    %376 = arith.addf %375, %250 : vector<8x32xf32>
    %377 = arith.mulf %372, %376 : vector<8x32xf32>
    %378 = arith.addf %374, %377 : vector<8x32xf32>
    %379 = math.tanh %378 : vector<8x32xf32>
    %380 = arith.subf %356, %379 : vector<8x32xf32>
    %381 = arith.mulf %373, %380 : vector<8x32xf32>
    %382 = arith.addf %379, %381 : vector<8x32xf32>
    %c5_i32_119 = arith.constant 5 : i32
    %c8_i32_120 = arith.constant 8 : i32
    %383 = arith.muli %c5_i32_119, %c8_i32_120 : i32
    %384 = tpu.assume_multiple %383, 8 : i32
    %385 = arith.index_cast %384 : i32 to index
    %c0_121 = arith.constant 0 : index
    %386 = vector.load %arg14[%385, %c0_121] : memref<64x128xf32, #tpu.memory_space<vmem>>, vector<8x128xf32>
    %387 = arith.truncf %382 : vector<8x32xf32> to vector<8x32xbf16>
    %c0_122 = arith.constant 0 : index
    %c0_123 = arith.constant 0 : index
    %388 = vector.load %arg7[%c0_122, %c0_123] : memref<32x128xbf16, #tpu.memory_space<vmem>>, vector<32x128xbf16>
    %cst_124 = arith.constant dense<0.000000e+00> : vector<8x128xf32>
    %389 = tpu.matmul %387, %388, %cst_124 {dimension_numbers = #tpu.dot_dimension_numbers<[1], [0], [0], [1], [0, 0, 1, 1], [], []>} : vector<8x32xbf16>, vector<32x128xbf16>, vector<8x128xf32> -> vector<8x128xf32>
    %390 = vector.extract_strided_slice %386 {offsets = [0, 0], sizes = [8, 64], strides = [1, 1]} : vector<8x128xf32> to vector<8x64xf32>
    %391 = vector.extract_strided_slice %389 {offsets = [0, 0], sizes = [8, 64], strides = [1, 1]} : vector<8x128xf32> to vector<8x64xf32>
    %392 = arith.addf %390, %391 : vector<8x64xf32>
    %393 = arith.negf %392 : vector<8x64xf32>
    %394 = math.exp %393 : vector<8x64xf32>
    %cst_125 = arith.constant 1.000000e+00 : f32
    %395 = vector.broadcast %cst_125 : f32 to vector<8x64xf32>
    %396 = arith.addf %395, %394 : vector<8x64xf32>
    %397 = arith.divf %395, %396 : vector<8x64xf32>
    %398 = vector.extract_strided_slice %397 {offsets = [0, 0], sizes = [8, 32], strides = [1, 1]} : vector<8x64xf32> to vector<8x32xf32>
    %399 = vector.extract_strided_slice %397 {offsets = [0, 32], sizes = [8, 32], strides = [1, 1]} : vector<8x64xf32> to vector<8x32xf32>
    %400 = vector.extract_strided_slice %386 {offsets = [0, 64], sizes = [8, 32], strides = [1, 1]} : vector<8x128xf32> to vector<8x32xf32>
    %401 = vector.extract_strided_slice %389 {offsets = [0, 64], sizes = [8, 32], strides = [1, 1]} : vector<8x128xf32> to vector<8x32xf32>
    %402 = arith.addf %401, %250 : vector<8x32xf32>
    %403 = arith.mulf %398, %402 : vector<8x32xf32>
    %404 = arith.addf %400, %403 : vector<8x32xf32>
    %405 = math.tanh %404 : vector<8x32xf32>
    %406 = arith.subf %382, %405 : vector<8x32xf32>
    %407 = arith.mulf %399, %406 : vector<8x32xf32>
    %408 = arith.addf %405, %407 : vector<8x32xf32>
    %c6_i32_126 = arith.constant 6 : i32
    %c8_i32_127 = arith.constant 8 : i32
    %409 = arith.muli %c6_i32_126, %c8_i32_127 : i32
    %410 = tpu.assume_multiple %409, 8 : i32
    %411 = arith.index_cast %410 : i32 to index
    %c0_128 = arith.constant 0 : index
    %412 = vector.load %arg14[%411, %c0_128] : memref<64x128xf32, #tpu.memory_space<vmem>>, vector<8x128xf32>
    %413 = arith.truncf %408 : vector<8x32xf32> to vector<8x32xbf16>
    %c0_129 = arith.constant 0 : index
    %c0_130 = arith.constant 0 : index
    %414 = vector.load %arg7[%c0_129, %c0_130] : memref<32x128xbf16, #tpu.memory_space<vmem>>, vector<32x128xbf16>
    %cst_131 = arith.constant dense<0.000000e+00> : vector<8x128xf32>
    %415 = tpu.matmul %413, %414, %cst_131 {dimension_numbers = #tpu.dot_dimension_numbers<[1], [0], [0], [1], [0, 0, 1, 1], [], []>} : vector<8x32xbf16>, vector<32x128xbf16>, vector<8x128xf32> -> vector<8x128xf32>
    %416 = vector.extract_strided_slice %412 {offsets = [0, 0], sizes = [8, 64], strides = [1, 1]} : vector<8x128xf32> to vector<8x64xf32>
    %417 = vector.extract_strided_slice %415 {offsets = [0, 0], sizes = [8, 64], strides = [1, 1]} : vector<8x128xf32> to vector<8x64xf32>
    %418 = arith.addf %416, %417 : vector<8x64xf32>
    %419 = arith.negf %418 : vector<8x64xf32>
    %420 = math.exp %419 : vector<8x64xf32>
    %cst_132 = arith.constant 1.000000e+00 : f32
    %421 = vector.broadcast %cst_132 : f32 to vector<8x64xf32>
    %422 = arith.addf %421, %420 : vector<8x64xf32>
    %423 = arith.divf %421, %422 : vector<8x64xf32>
    %424 = vector.extract_strided_slice %423 {offsets = [0, 0], sizes = [8, 32], strides = [1, 1]} : vector<8x64xf32> to vector<8x32xf32>
    %425 = vector.extract_strided_slice %423 {offsets = [0, 32], sizes = [8, 32], strides = [1, 1]} : vector<8x64xf32> to vector<8x32xf32>
    %426 = vector.extract_strided_slice %412 {offsets = [0, 64], sizes = [8, 32], strides = [1, 1]} : vector<8x128xf32> to vector<8x32xf32>
    %427 = vector.extract_strided_slice %415 {offsets = [0, 64], sizes = [8, 32], strides = [1, 1]} : vector<8x128xf32> to vector<8x32xf32>
    %428 = arith.addf %427, %250 : vector<8x32xf32>
    %429 = arith.mulf %424, %428 : vector<8x32xf32>
    %430 = arith.addf %426, %429 : vector<8x32xf32>
    %431 = math.tanh %430 : vector<8x32xf32>
    %432 = arith.subf %408, %431 : vector<8x32xf32>
    %433 = arith.mulf %425, %432 : vector<8x32xf32>
    %434 = arith.addf %431, %433 : vector<8x32xf32>
    %c7_i32_133 = arith.constant 7 : i32
    %c8_i32_134 = arith.constant 8 : i32
    %435 = arith.muli %c7_i32_133, %c8_i32_134 : i32
    %436 = tpu.assume_multiple %435, 8 : i32
    %437 = arith.index_cast %436 : i32 to index
    %c0_135 = arith.constant 0 : index
    %438 = vector.load %arg14[%437, %c0_135] : memref<64x128xf32, #tpu.memory_space<vmem>>, vector<8x128xf32>
    %439 = arith.truncf %434 : vector<8x32xf32> to vector<8x32xbf16>
    %c0_136 = arith.constant 0 : index
    %c0_137 = arith.constant 0 : index
    %440 = vector.load %arg7[%c0_136, %c0_137] : memref<32x128xbf16, #tpu.memory_space<vmem>>, vector<32x128xbf16>
    %cst_138 = arith.constant dense<0.000000e+00> : vector<8x128xf32>
    %441 = tpu.matmul %439, %440, %cst_138 {dimension_numbers = #tpu.dot_dimension_numbers<[1], [0], [0], [1], [0, 0, 1, 1], [], []>} : vector<8x32xbf16>, vector<32x128xbf16>, vector<8x128xf32> -> vector<8x128xf32>
    %442 = vector.extract_strided_slice %438 {offsets = [0, 0], sizes = [8, 64], strides = [1, 1]} : vector<8x128xf32> to vector<8x64xf32>
    %443 = vector.extract_strided_slice %441 {offsets = [0, 0], sizes = [8, 64], strides = [1, 1]} : vector<8x128xf32> to vector<8x64xf32>
    %444 = arith.addf %442, %443 : vector<8x64xf32>
    %445 = arith.negf %444 : vector<8x64xf32>
    %446 = math.exp %445 : vector<8x64xf32>
    %cst_139 = arith.constant 1.000000e+00 : f32
    %447 = vector.broadcast %cst_139 : f32 to vector<8x64xf32>
    %448 = arith.addf %447, %446 : vector<8x64xf32>
    %449 = arith.divf %447, %448 : vector<8x64xf32>
    %450 = vector.extract_strided_slice %449 {offsets = [0, 0], sizes = [8, 32], strides = [1, 1]} : vector<8x64xf32> to vector<8x32xf32>
    %451 = vector.extract_strided_slice %449 {offsets = [0, 32], sizes = [8, 32], strides = [1, 1]} : vector<8x64xf32> to vector<8x32xf32>
    %452 = vector.extract_strided_slice %438 {offsets = [0, 64], sizes = [8, 32], strides = [1, 1]} : vector<8x128xf32> to vector<8x32xf32>
    %453 = vector.extract_strided_slice %441 {offsets = [0, 64], sizes = [8, 32], strides = [1, 1]} : vector<8x128xf32> to vector<8x32xf32>
    %454 = arith.addf %453, %250 : vector<8x32xf32>
    %455 = arith.mulf %450, %454 : vector<8x32xf32>
    %456 = arith.addf %452, %455 : vector<8x32xf32>
    %457 = math.tanh %456 : vector<8x32xf32>
    %458 = arith.subf %434, %457 : vector<8x32xf32>
    %459 = arith.mulf %451, %458 : vector<8x32xf32>
    %460 = arith.addf %457, %459 : vector<8x32xf32>
    %c8_i32_140 = arith.constant 8 : i32
    %c1_141 = arith.constant 1 : index
    %c0_142 = arith.constant 0 : index
    %c0_143 = arith.constant 0 : index
    %461 = vector.load %arg13[%c1_141, %c0_142, %c0_143] : memref<2x8x32xf32, #tpu.memory_space<vmem>>, vector<1x8x32xf32>
    %462 = vector.shape_cast %461 : vector<1x8x32xf32> to vector<8x32xf32>
    %463 = vector.shape_cast %460 : vector<8x32xf32> to vector<1x8x32xf32>
    tpu.vector_store %arg13[%c1_141, %c0_142, %c0_143], %463 {strides = array<i32>} : memref<2x8x32xf32, #tpu.memory_space<vmem>>, vector<1x8x32xf32>,
    %cst_144 = arith.constant 0.000000e+00 : f32
    %464 = vector.broadcast %cst_144 : f32 to vector<8x32xf32>
    %465 = arith.maximumf %460, %464 : vector<8x32xf32>
    %466 = arith.truncf %465 : vector<8x32xf32> to vector<8x32xbf16>
    %c0_145 = arith.constant 0 : index
    %c0_146 = arith.constant 0 : index
    %467 = vector.load %arg10[%c0_145, %c0_146] : memref<32x128xbf16, #tpu.memory_space<vmem>>, vector<32x128xbf16>
    %cst_147 = arith.constant dense<0.000000e+00> : vector<8x128xf32>
    %468 = tpu.matmul %466, %467, %cst_147 {dimension_numbers = #tpu.dot_dimension_numbers<[1], [0], [0], [1], [0, 0, 1, 1], [], []>} : vector<8x32xbf16>, vector<32x128xbf16>, vector<8x128xf32> -> vector<8x128xf32>
    %c0_148 = arith.constant 0 : index
    %c0_149 = arith.constant 0 : index
    %469 = vector.load %arg11[%c0_148, %c0_149] : memref<1x128xf32, #tpu.memory_space<vmem>>, vector<1x128xf32>
    %470 = vector.broadcast %469 : vector<1x128xf32> to vector<8x128xf32>
    %471 = arith.addf %468, %470 : vector<8x128xf32>
    %c0_150 = arith.constant 0 : index
    %c0_151 = arith.constant 0 : index
    %472 = vector.load %arg12[%c0_150, %c0_151] : memref<8x128xf32, #tpu.memory_space<vmem>>, vector<8x128xf32>
    tpu.vector_store %arg12[%c0_150, %c0_151], %471 {strides = array<i32>} : memref<8x128xf32, #tpu.memory_space<vmem>>, vector<8x128xf32>,
    return
  }
}

</mosaic_0001>

<llo_original>
// kernel: gru_net_forward.1
$region0: #{gru_net_forward.1}
  #allocation0 [shape = 'u32[]', space=smem, size = 0x4, offset = 0x4, fixed_abs, tag = 'smem constant byte address 0x4 - core index']
  #allocation1 [shape = 'u32[144,128]{1,0:T(1,128)}', space=vmem, size = 0x12000, scoped, tag = 'internal scratch']
  #allocation2 [shape = 'f32[64,128]{1,0:T(8,128)}', space=vmem, size = 0x8000, scoped, tag = 'scratch operand']
  #allocation3 [shape = 'f32[64,32]{1,0:T(8,128)}', space=vmem, size = 0x8000, scoped, tag = 'scratch operand']
  %s0 = inlined_call_operand.vmem [shape: f32[64,16], index: 0, kind: input, shape index: {}]
  %s1 = inlined_call_operand.vmem [shape: f32[2,8,32], index: 1, kind: input, shape index: {}]
  %s2 = inlined_call_operand.vmem [shape: bf16[16,128], index: 2, kind: input, shape index: {}]
  %s3 = inlined_call_operand.vmem [shape: bf16[32,128], index: 3, kind: input, shape index: {}]
  %s4 = inlined_call_operand.vmem [shape: f32[1,128], index: 4, kind: input, shape index: {}]
  %s5 = inlined_call_operand.vmem [shape: f32[1,32], index: 5, kind: input, shape index: {}]
  %s6 = inlined_call_operand.vmem [shape: bf16[32,128], index: 6, kind: input, shape index: {}]
  %s7 = inlined_call_operand.vmem [shape: bf16[32,128], index: 7, kind: input, shape index: {}]
  %s8 = inlined_call_operand.vmem [shape: f32[1,128], index: 8, kind: input, shape index: {}]
  %s9 = inlined_call_operand.vmem [shape: f32[1,32], index: 9, kind: input, shape index: {}]
  %s10 = inlined_call_operand.vmem [shape: bf16[32,128], index: 10, kind: input, shape index: {}]
  %s11 = inlined_call_operand.vmem [shape: f32[1,128], index: 11, kind: input, shape index: {}]
  %s12 = inlined_call_operand.vmem [shape: f32[8,128], index: 12, kind: output, shape index: {0}]
  %s13 = inlined_call_operand.vmem [shape: f32[2,8,32], index: 13, kind: output, shape index: {1}]
  %14 = xla_tuple %s12, %s13
  %s15 = sld [smem:[#allocation0]]
  $region66: #{gru_net_forward.1} parent=0
    _
  %s17 = ssub.s32 1, %s15
  %s18 = scalar_select 0, %s17, %s15
  // Predicated region
  $region2: #{gru_net_forward.1} parent=0 // pred_check
    _
  $region3: #{gru_net_forward.1} parent=0 // pred_check_branch
    %20 = sbr.rel (0) target = $region5
  $region4: #{gru_net_forward.1} parent=0 // pred_region
    _
  $region5: #{gru_net_forward.1} parent=0 // pred_fallthru
    _
  // Predicated region
  $region6: #{gru_net_forward.1} parent=0 // pred_check
    _
  $region7: #{gru_net_forward.1} parent=0 // pred_check_branch
    %22 = sbr.rel (0) target = $region9
  $region8: #{gru_net_forward.1} parent=0 // pred_region
    _
  $region9: #{gru_net_forward.1} parent=0 // pred_fallthru
    _
  // Predicated region
  $region10: #{gru_net_forward.1} parent=0 // pred_check
    _
  $region11: #{gru_net_forward.1} parent=0 // pred_check_branch
    %24 = sbr.rel (0) target = $region13
  $region12: #{gru_net_forward.1} parent=0 // pred_region
    _
  $region13: #{gru_net_forward.1} parent=0 // pred_fallthru
    _
  // Predicated region
  $region14: #{gru_net_forward.1} parent=0 // pred_check
    _
  $region15: #{gru_net_forward.1} parent=0 // pred_check_branch
    %26 = sbr.rel (0) target = $region17
  $region16: #{gru_net_forward.1} parent=0 // pred_region
    _
  $region17: #{gru_net_forward.1} parent=0 // pred_fallthru
    _
  // Predicated region
  $region18: #{gru_net_forward.1} parent=0 // pred_check
    _
  $region19: #{gru_net_forward.1} parent=0 // pred_check_branch
    %28 = sbr.rel (0) target = $region21
  $region20: #{gru_net_forward.1} parent=0 // pred_region
    _
  $region21: #{gru_net_forward.1} parent=0 // pred_fallthru
    _
  // Predicated region
  $region22: #{gru_net_forward.1} parent=0 // pred_check
    _
  $region23: #{gru_net_forward.1} parent=0 // pred_check_branch
    %30 = sbr.rel (0) target = $region25
  $region24: #{gru_net_forward.1} parent=0 // pred_region
    _
  $region25: #{gru_net_forward.1} parent=0 // pred_fallthru
    _
  // Predicated region
  $region26: #{gru_net_forward.1} parent=0 // pred_check
    _
  $region27: #{gru_net_forward.1} parent=0 // pred_check_branch
    %32 = sbr.rel (0) target = $region29
  $region28: #{gru_net_forward.1} parent=0 // pred_region
    _
  $region29: #{gru_net_forward.1} parent=0 // pred_fallthru
    _
  // Predicated region
  $region30: #{gru_net_forward.1} parent=0 // pred_check
    _
  $region31: #{gru_net_forward.1} parent=0 // pred_check_branch
    %34 = sbr.rel (0) target = $region33
  $region32: #{gru_net_forward.1} parent=0 // pred_region
    _
  $region33: #{gru_net_forward.1} parent=0 // pred_fallthru
    _
  // Predicated region
  $region34: #{gru_net_forward.1} parent=0 // pred_check
    _
  $region35: #{gru_net_forward.1} parent=0 // pred_check_branch
    %36 = sbr.rel (0) target = $region37
  $region36: #{gru_net_forward.1} parent=0 // pred_region
    _
  $region37: #{gru_net_forward.1} parent=0 // pred_fallthru
    _
  // Predicated region
  $region38: #{gru_net_forward.1} parent=0 // pred_check
    _
  $region39: #{gru_net_forward.1} parent=0 // pred_check_branch
    %38 = sbr.rel (0) target = $region41
  $region40: #{gru_net_forward.1} parent=0 // pred_region
    _
  $region41: #{gru_net_forward.1} parent=0 // pred_fallthru
    _
  // Predicated region
  $region42: #{gru_net_forward.1} parent=0 // pred_check
    _
  $region43: #{gru_net_forward.1} parent=0 // pred_check_branch
    %40 = sbr.rel (0) target = $region45
  $region44: #{gru_net_forward.1} parent=0 // pred_region
    _
  $region45: #{gru_net_forward.1} parent=0 // pred_fallthru
    _
  // Predicated region
  $region46: #{gru_net_forward.1} parent=0 // pred_check
    _
  $region47: #{gru_net_forward.1} parent=0 // pred_check_branch
    %42 = sbr.rel (0) target = $region49
  $region48: #{gru_net_forward.1} parent=0 // pred_region
    _
  $region49: #{gru_net_forward.1} parent=0 // pred_fallthru
    _
  %v44 = vld [vmem:[%s0] sm:$0xff]
  %v45 = vld [vmem:[%s0 + $0x8] sm:$0xff]
  %v46 = vld [vmem:[%s0 + $0x10] sm:$0xff]
  %v47 = vld [vmem:[%s0 + $0x18] sm:$0xff]
  %v48 = vld [vmem:[%s0 + $0x20] sm:$0xff]
  %v49 = vld [vmem:[%s0 + $0x28] sm:$0xff]
  %v50 = vld [vmem:[%s0 + $0x30] sm:$0xff]
  %v51 = vld [vmem:[%s0 + $0x38] sm:$0xff]
  %v52 = vpack.c.bf16 %v45, %v44
  %v53 = vpack.c.bf16 %v47, %v46
  %v54 = vpack.c.bf16 %v49, %v48
  %v55 = vpack.c.bf16 %v51, %v50
  %v56 = vld [vmem:[%s2] sm:$0xf]
  %v57 = vld [vmem:[%s2 + $0x4] sm:$0xf]
  %v58 = vld [vmem:[%s4] sm:$0x1]
  %v60 = vlaneseq
  %v61 = vshrl.u32 %v60, 7
  %v62 = vsub.s32 0, %v61
  %v63 = vrot.slane %v58, %v62
  %v67 = vunpack.c.l.b16 %v56
  %v68 = vunpack.c.l.b16 %v57
  %v69 = vpack.c.b16 %v68, %v67
  %vm71 = vcmask 130048
  %v73 = vsel %vm71, %v52, 0
  %v76 = vsel %vm71, %v53, 0
  %v79 = vsel %vm71, %v54, 0
  %v82 = vsel %vm71, %v55, 0
  %84 = vmatprep.subr.bf16.mxu0 0
  %85 = vmatpush1.bf16.msra.mxu0 %v69
  %86 = vmatprep.subr.bf16.mxu0 0
  %87 = vmatpush1.bf16.msra.mxu0 0
  %88 = vmatprep.subr.bf16.mxu0 0
  %89 = vmatpush1.bf16.msra.mxu0 0
  %90 = vmatprep.subr.bf16.mxu0 0
  %91 = vmatpush1.bf16.msra.mxu0 0
  %92 = vmatprep.subr.bf16.mxu0 0
  %93 = vmatpush1.bf16.msra.mxu0 0
  %94 = vmatprep.subr.bf16.mxu0 0
  %95 = vmatpush1.bf16.msra.mxu0 0
  %96 = vmatprep.subr.bf16.mxu0 0
  %97 = vmatpush1.bf16.msra.mxu0 0
  %98 = vmatprep.subr.bf16.mxu0 0
  %99 = vmatpush1.bf16.msra.mxu0 0
  %100 = vmatprep.subr.bf16.mxu0 0
  %101 = vmatpush1.bf16.msra.mxu0 0
  %102 = vmatprep.subr.bf16.mxu0 0
  %103 = vmatpush1.bf16.msra.mxu0 0
  %104 = vmatprep.subr.bf16.mxu0 0
  %105 = vmatpush1.bf16.msra.mxu0 0
  %106 = vmatprep.subr.bf16.mxu0 0
  %107 = vmatpush1.bf16.msra.mxu0 0
  %108 = vmatprep.subr.bf16.mxu0 0
  %109 = vmatpush1.bf16.msra.mxu0 0
  %110 = vmatprep.subr.bf16.mxu0 0
  %111 = vmatpush1.bf16.msra.mxu0 0
  %112 = vmatprep.subr.bf16.mxu0 0
  %113 = vmatpush1.bf16.msra.mxu0 0
  %114 = vmatprep.subr.bf16.mxu0 0
  %115 = vmatpush1.bf16.msra.mxu0 0
  %116 = vmatprep.mubr.bf16.mxu0 0
  %117 = vmatmul.mubr.bf16.gmra.mrb[0].mxu0 %v73
  %v118 = vpop.f32.mrb[0].mxu0
  %v119 = vadd.f32 %v63, %v118
  %v120 = vpop.f32.mrb[0].mxu0
  %v121 = vpop.f32.mrb[0].mxu0
  %v122 = vadd.f32 %v63, %v121
  %v123 = vpop.f32.mrb[0].mxu0
  %124 = vmatprep.mubr.bf16.mxu0 0
  %125 = vmatmul.mubr.bf16.gmra.mrb[0].mxu0 %v76
  %v126 = vpop.f32.mrb[0].mxu0
  %v127 = vadd.f32 %v63, %v126
  %v128 = vpop.f32.mrb[0].mxu0
  %v129 = vpop.f32.mrb[0].mxu0
  %v130 = vadd.f32 %v63, %v129
  %v131 = vpop.f32.mrb[0].mxu0
  %132 = vmatprep.mubr.bf16.mxu0 0
  %133 = vmatmul.mubr.bf16.gmra.mrb[0].mxu0 %v79
  %v134 = vpop.f32.mrb[0].mxu0
  %v135 = vadd.f32 %v63, %v134
  %v136 = vpop.f32.mrb[0].mxu0
  %v137 = vpop.f32.mrb[0].mxu0
  %v138 = vadd.f32 %v63, %v137
  %v139 = vpop.f32.mrb[0].mxu0
  %140 = vmatprep.mubr.bf16.mxu0 0
  %141 = vmatmul.mubr.bf16.gmra.mrb[0].mxu0 %v82
  %v142 = vpop.f32.mrb[0].mxu0
  %v143 = vadd.f32 %v63, %v142
  %v144 = vpop.f32.mrb[0].mxu0
  %v145 = vpop.f32.mrb[0].mxu0
  %v146 = vadd.f32 %v63, %v145
  %v147 = vpop.f32.mrb[0].mxu0
  %148 = vdwg.mxu0
  %149 = vst [vmem:[#allocation2] sm:$0xff] %v119
  %150 = vst [vmem:[#allocation2 + $0x8] sm:$0xff] %v122
  %151 = vst [vmem:[#allocation2 + $0x10] sm:$0xff] %v127
  %152 = vst [vmem:[#allocation2 + $0x18] sm:$0xff] %v130
  %153 = vst [vmem:[#allocation2 + $0x20] sm:$0xff] %v135
  %154 = vst [vmem:[#allocation2 + $0x28] sm:$0xff] %v138
  %155 = vst [vmem:[#allocation2 + $0x30] sm:$0xff] %v143
  %156 = vst [vmem:[#allocation2 + $0x38] sm:$0xff] %v146
  %v157 = vld [vmem:[%s5] sm:$0x1]
  %v159 = vlaneseq
  %v160 = vshrl.u32 %v159, 7
  %v161 = vsub.s32 0, %v160
  %v162 = vrot.slane %v157, %v161
  %v163 = vld [vmem:[%s1] sm:$0xff]
  %v164 = vld [vmem:[#allocation2] sm:$0xff]
  %v165 = vpack.c.bf16 %v163, %v163
  %v166 = vld [vmem:[%s3] sm:$0xf]
  %v167 = vld [vmem:[%s3 + $0x4] sm:$0xf]
  %v168 = vld [vmem:[%s3 + $0x8] sm:$0xf]
  %v169 = vld [vmem:[%s3 + $0xc] sm:$0xf]
  %v174 = vunpack.c.l.b16 %v166
  %v175 = vunpack.c.l.b16 %v167
  %v176 = vunpack.c.l.b16 %v168
  %v177 = vunpack.c.l.b16 %v169
  %v178 = vpack.c.b16 %v175, %v174
  %v179 = vpack.c.b16 %v177, %v176
  %vm182 = vcmask 261120
  %v184 = vsel %vm182, %v165, 0
  %186 = vmatprep.subr.bf16.mxu0 0
  %187 = vmatpush1.bf16.msra.mxu0 %v178
  %188 = vmatprep.subr.bf16.mxu0 0
  %189 = vmatpush1.bf16.msra.mxu0 %v179
  %190 = vmatprep.subr.bf16.mxu0 0
  %191 = vmatpush1.bf16.msra.mxu0 0
  %192 = vmatprep.subr.bf16.mxu0 0
  %193 = vmatpush1.bf16.msra.mxu0 0
  %194 = vmatprep.subr.bf16.mxu0 0
  %195 = vmatpush1.bf16.msra.mxu0 0
  %196 = vmatprep.subr.bf16.mxu0 0
  %197 = vmatpush1.bf16.msra.mxu0 0
  %198 = vmatprep.subr.bf16.mxu0 0
  %199 = vmatpush1.bf16.msra.mxu0 0
  %200 = vmatprep.subr.bf16.mxu0 0
  %201 = vmatpush1.bf16.msra.mxu0 0
  %202 = vmatprep.subr.bf16.mxu0 0
  %203 = vmatpush1.bf16.msra.mxu0 0
  %204 = vmatprep.subr.bf16.mxu0 0
  %205 = vmatpush1.bf16.msra.mxu0 0
  %206 = vmatprep.subr.bf16.mxu0 0
  %207 = vmatpush1.bf16.msra.mxu0 0
  %208 = vmatprep.subr.bf16.mxu0 0
  %209 = vmatpush1.bf16.msra.mxu0 0
  %210 = vmatprep.subr.bf16.mxu0 0
  %211 = vmatpush1.bf16.msra.mxu0 0
  %212 = vmatprep.subr.bf16.mxu0 0
  %213 = vmatpush1.bf16.msra.mxu0 0
  %214 = vmatprep.subr.bf16.mxu0 0
  %215 = vmatpush1.bf16.msra.mxu0 0
  %216 = vmatprep.subr.bf16.mxu0 0
  %217 = vmatpush1.bf16.msra.mxu0 0
  %218 = vmatprep.mubr.bf16.mxu0 0
  %219 = vmatmul.mubr.bf16.gmra.mrb[0].mxu0 %v184
  %v220 = vpop.f32.mrb[0].mxu0
  %v221 = vadd.f32 0.0, %v220
  %v222 = vpop.f32.mrb[0].mxu0
  %v223 = vpop.f32.mrb[0].mxu0
  %v224 = vpop.f32.mrb[0].mxu0
  %225 = vdwg.mxu0
  %v226 = vadd.f32 %v164, %v221
  %v227 = vxor.u32 %v226, 2147483648
  %v228 = vmul.f32 %v227, 1.442695
  %v229 = vpow.pop %v228
  %v230 = vadd.f32 %v229, 1.0
  %v231 = vrcp.pop %v230
  %v232 = vmul.f32 1.0, %v231
  %233 = vrot.lane.b32.xlu0 %v162, 64
  %v234 = vpop.permute.xlu0 %233
  %v236 = vadd.f32 %v221, %v234
  %238 = vrot.lane.b32.xlu0 %v236, 64
  %v239 = vpop.permute.xlu0 %238
  %v241 = vmul.f32 %v232, %v239
  %243 = vrot.lane.b32.xlu0 %v241, 64
  %v244 = vpop.permute.xlu0 %243
  %v246 = vadd.f32 %v164, %v244
  %v247 = vtanh.pop %v246
  %249 = vrot.lane.b32.xlu0 %v247, 64
  %v250 = vpop.permute.xlu0 %249
  %v252 = vsub.f32 %v163, %v250
  %254 = vrot.lane.b32.xlu0 %v252, 32
  %v255 = vpop.permute.xlu0 %254
  %v257 = vmul.f32 %v232, %v255
  %259 = vrot.lane.b32.xlu0 %v257, 32
  %v260 = vpop.permute.xlu0 %259
  %v262 = vadd.f32 %v247, %v260
  %264 = vrot.lane.b32.xlu0 %v262, 64
  %v265 = vpop.permute.xlu0 %264
  %267 = vst.msk [vmem:[#allocation3] sm:$0xff] %vm182, %v265
  %s268 = scalar_lea.vmem [#allocation2], 8
  %v269 = vld [vmem:[%s268] sm:$0xff]
  %v270 = vpack.c.bf16 %v262, %v262
  %v271 = vld [vmem:[%s3] sm:$0xf]
  %v272 = vld [vmem:[%s3 + $0x4] sm:$0xf]
  %v273 = vld [vmem:[%s3 + $0x8] sm:$0xf]
  %v274 = vld [vmem:[%s3 + $0xc] sm:$0xf]
  %276 = vrot.lane.b32.xlu0 %v270, 64
  %v277 = vpop.permute.xlu0 %276
  %v282 = vunpack.c.l.b16 %v271
  %v283 = vunpack.c.l.b16 %v272
  %v284 = vunpack.c.l.b16 %v273
  %v285 = vunpack.c.l.b16 %v274
  %v286 = vpack.c.b16 %v283, %v282
  %v287 = vpack.c.b16 %v285, %v284
  %v291 = vsel %vm182, %v277, 0
  %293 = vmatprep.subr.bf16.mxu0 0
  %294 = vmatpush1.bf16.msra.mxu0 %v286
  %295 = vmatprep.subr.bf16.mxu0 0
  %296 = vmatpush1.bf16.msra.mxu0 %v287
  %297 = vmatprep.subr.bf16.mxu0 0
  %298 = vmatpush1.bf16.msra.mxu0 0
  %299 = vmatprep.subr.bf16.mxu0 0
  %300 = vmatpush1.bf16.msra.mxu0 0
  %301 = vmatprep.subr.bf16.mxu0 0
  %302 = vmatpush1.bf16.msra.mxu0 0
  %303 = vmatprep.subr.bf16.mxu0 0
  %304 = vmatpush1.bf16.msra.mxu0 0
  %305 = vmatprep.subr.bf16.mxu0 0
  %306 = vmatpush1.bf16.msra.mxu0 0
  %307 = vmatprep.subr.bf16.mxu0 0
  %308 = vmatpush1.bf16.msra.mxu0 0
  %309 = vmatprep.subr.bf16.mxu0 0
  %310 = vmatpush1.bf16.msra.mxu0 0
  %311 = vmatprep.subr.bf16.mxu0 0
  %312 = vmatpush1.bf16.msra.mxu0 0
  %313 = vmatprep.subr.bf16.mxu0 0
  %314 = vmatpush1.bf16.msra.mxu0 0
  %315 = vmatprep.subr.bf16.mxu0 0
  %316 = vmatpush1.bf16.msra.mxu0 0
  %317 = vmatprep.subr.bf16.mxu0 0
  %318 = vmatpush1.bf16.msra.mxu0 0
  %319 = vmatprep.subr.bf16.mxu0 0
  %320 = vmatpush1.bf16.msra.mxu0 0
  %321 = vmatprep.subr.bf16.mxu0 0
  %322 = vmatpush1.bf16.msra.mxu0 0
  %323 = vmatprep.subr.bf16.mxu0 0
  %324 = vmatpush1.bf16.msra.mxu0 0
  %325 = vmatprep.mubr.bf16.mxu0 0
  %326 = vmatmul.mubr.bf16.gmra.mrb[0].mxu0 %v291
  %v327 = vpop.f32.mrb[0].mxu0
  %v328 = vadd.f32 0.0, %v327
  %v329 = vpop.f32.mrb[0].mxu0
  %v330 = vpop.f32.mrb[0].mxu0
  %v331 = vpop.f32.mrb[0].mxu0
  %332 = vdwg.mxu0
  %v333 = vadd.f32 %v269, %v328
  %v334 = vxor.u32 %v333, 2147483648
  %v335 = vmul.f32 %v334, 1.442695
  %v336 = vpow.pop %v335
  %v337 = vadd.f32 %v336, 1.0
  %v338 = vrcp.pop %v337
  %v339 = vmul.f32 1.0, %v338
  %v340 = vadd.f32 %v328, %v234
  %342 = vrot.lane.b32.xlu0 %v340, 64
  %v343 = vpop.permute.xlu0 %342
  %v345 = vmul.f32 %v339, %v343
  %347 = vrot.lane.b32.xlu0 %v345, 64
  %v348 = vpop.permute.xlu0 %347
  %v350 = vadd.f32 %v269, %v348
  %v351 = vtanh.pop %v350
  %v352 = vsub.f32 %v262, %v351
  %354 = vrot.lane.b32.xlu0 %v352, 96
  %v355 = vpop.permute.xlu0 %354
  %v357 = vmul.f32 %v339, %v355
  %359 = vrot.lane.b32.xlu0 %v357, 32
  %v360 = vpop.permute.xlu0 %359
  %v362 = vadd.f32 %v351, %v360
  %364 = vrot.lane.b32.xlu0 %v362, 64
  %v365 = vpop.permute.xlu0 %364
  %s367 = scalar_lea.vmem [#allocation3], 8
  %368 = vst.msk [vmem:[%s367] sm:$0xff] %vm182, %v365
  %s369 = scalar_lea.vmem [#allocation2], 16
  %v370 = vld [vmem:[%s369] sm:$0xff]
  %v371 = vpack.c.bf16 %v362, %v362
  %v372 = vld [vmem:[%s3] sm:$0xf]
  %v373 = vld [vmem:[%s3 + $0x4] sm:$0xf]
  %v374 = vld [vmem:[%s3 + $0x8] sm:$0xf]
  %v375 = vld [vmem:[%s3 + $0xc] sm:$0xf]
  %377 = vrot.lane.b32.xlu0 %v371, 64
  %v378 = vpop.permute.xlu0 %377
  %v383 = vunpack.c.l.b16 %v372
  %v384 = vunpack.c.l.b16 %v373
  %v385 = vunpack.c.l.b16 %v374
  %v386 = vunpack.c.l.b16 %v375
  %v387 = vpack.c.b16 %v384, %v383
  %v388 = vpack.c.b16 %v386, %v385
  %v392 = vsel %vm182, %v378, 0
  %394 = vmatprep.subr.bf16.mxu0 0
  %395 = vmatpush1.bf16.msra.mxu0 %v387
  %396 = vmatprep.subr.bf16.mxu0 0
  %397 = vmatpush1.bf16.msra.mxu0 %v388
  %398 = vmatprep.subr.bf16.mxu0 0
  %399 = vmatpush1.bf16.msra.mxu0 0
  %400 = vmatprep.subr.bf16.mxu0 0
  %401 = vmatpush1.bf16.msra.mxu0 0
  %402 = vmatprep.subr.bf16.mxu0 0
  %403 = vmatpush1.bf16.msra.mxu0 0
  %404 = vmatprep.subr.bf16.mxu0 0
  %405 = vmatpush1.bf16.msra.mxu0 0
  %406 = vmatprep.subr.bf16.mxu0 0
  %407 = vmatpush1.bf16.msra.mxu0 0
  %408 = vmatprep.subr.bf16.mxu0 0
  %409 = vmatpush1.bf16.msra.mxu0 0
  %410 = vmatprep.subr.bf16.mxu0 0
  %411 = vmatpush1.bf16.msra.mxu0 0
  %412 = vmatprep.subr.bf16.mxu0 0
  %413 = vmatpush1.bf16.msra.mxu0 0
  %414 = vmatprep.subr.bf16.mxu0 0
  %415 = vmatpush1.bf16.msra.mxu0 0
  %416 = vmatprep.subr.bf16.mxu0 0
  %417 = vmatpush1.bf16.msra.mxu0 0
  %418 = vmatprep.subr.bf16.mxu0 0
  %419 = vmatpush1.bf16.msra.mxu0 0
  %420 = vmatprep.subr.bf16.mxu0 0
  %421 = vmatpush1.bf16.msra.mxu0 0
  %422 = vmatprep.subr.bf16.mxu0 0
  %423 = vmatpush1.bf16.msra.mxu0 0
  %424 = vmatprep.subr.bf16.mxu0 0
  %425 = vmatpush1.bf16.msra.mxu0 0
  %426 = vmatprep.mubr.bf16.mxu0 0
  %427 = vmatmul.mubr.bf16.gmra.mrb[0].mxu0 %v392
  %v428 = vpop.f32.mrb[0].mxu0
  %v429 = vadd.f32 0.0, %v428
  %v430 = vpop.f32.mrb[0].mxu0
  %v431 = vpop.f32.mrb[0].mxu0
  %v432 = vpop.f32.mrb[0].mxu0
  %433 = vdwg.mxu0
  %v434 = vadd.f32 %v370, %v429
  %v435 = vxor.u32 %v434, 2147483648
  %v436 = vmul.f32 %v435, 1.442695
  %v437 = vpow.pop %v436
  %v438 = vadd.f32 %v437, 1.0
  %v439 = vrcp.pop %v438
  %v440 = vmul.f32 1.0, %v439
  %v441 = vadd.f32 %v429, %v234
  %443 = vrot.lane.b32.xlu0 %v441, 64
  %v444 = vpop.permute.xlu0 %443
  %v446 = vmul.f32 %v440, %v444
  %448 = vrot.lane.b32.xlu0 %v446, 64
  %v449 = vpop.permute.xlu0 %448
  %v451 = vadd.f32 %v370, %v449
  %v452 = vtanh.pop %v451
  %v453 = vsub.f32 %v362, %v452
  %455 = vrot.lane.b32.xlu0 %v453, 96
  %v456 = vpop.permute.xlu0 %455
  %v458 = vmul.f32 %v440, %v456
  %460 = vrot.lane.b32.xlu0 %v458, 32
  %v461 = vpop.permute.xlu0 %460
  %v463 = vadd.f32 %v452, %v461
  %465 = vrot.lane.b32.xlu0 %v463, 64
  %v466 = vpop.permute.xlu0 %465
  %s468 = scalar_lea.vmem [#allocation3], 16
  %469 = vst.msk [vmem:[%s468] sm:$0xff] %vm182, %v466
  %s470 = scalar_lea.vmem [#allocation2], 24
  %v471 = vld [vmem:[%s470] sm:$0xff]
  %v472 = vpack.c.bf16 %v463, %v463
  %v473 = vld [vmem:[%s3] sm:$0xf]
  %v474 = vld [vmem:[%s3 + $0x4] sm:$0xf]
  %v475 = vld [vmem:[%s3 + $0x8] sm:$0xf]
  %v476 = vld [vmem:[%s3 + $0xc] sm:$0xf]
  %478 = vrot.lane.b32.xlu0 %v472, 64
  %v479 = vpop.permute.xlu0 %478
  %v484 = vunpack.c.l.b16 %v473
  %v485 = vunpack.c.l.b16 %v474
  %v486 = vunpack.c.l.b16 %v475
  %v487 = vunpack.c.l.b16 %v476
  %v488 = vpack.c.b16 %v485, %v484
  %v489 = vpack.c.b16 %v487, %v486
  %v493 = vsel %vm182, %v479, 0
  %495 = vmatprep.subr.bf16.mxu0 0
  %496 = vmatpush1.bf16.msra.mxu0 %v488
  %497 = vmatprep.subr.bf16.mxu0 0
  %498 = vmatpush1.bf16.msra.mxu0 %v489
  %499 = vmatprep.subr.bf16.mxu0 0
  %500 = vmatpush1.bf16.msra.mxu0 0
  %501 = vmatprep.subr.bf16.mxu0 0
  %502 = vmatpush1.bf16.msra.mxu0 0
  %503 = vmatprep.subr.bf16.mxu0 0
  %504 = vmatpush1.bf16.msra.mxu0 0
  %505 = vmatprep.subr.bf16.mxu0 0
  %506 = vmatpush1.bf16.msra.mxu0 0
  %507 = vmatprep.subr.bf16.mxu0 0
  %508 = vmatpush1.bf16.msra.mxu0 0
  %509 = vmatprep.subr.bf16.mxu0 0
  %510 = vmatpush1.bf16.msra.mxu0 0
  %511 = vmatprep.subr.bf16.mxu0 0
  %512 = vmatpush1.bf16.msra.mxu0 0
  %513 = vmatprep.subr.bf16.mxu0 0
  %514 = vmatpush1.bf16.msra.mxu0 0
  %515 = vmatprep.subr.bf16.mxu0 0
  %516 = vmatpush1.bf16.msra.mxu0 0
  %517 = vmatprep.subr.bf16.mxu0 0
  %518 = vmatpush1.bf16.msra.mxu0 0
  %519 = vmatprep.subr.bf16.mxu0 0
  %520 = vmatpush1.bf16.msra.mxu0 0
  %521 = vmatprep.subr.bf16.mxu0 0
  %522 = vmatpush1.bf16.msra.mxu0 0
  %523 = vmatprep.subr.bf16.mxu0 0
  %524 = vmatpush1.bf16.msra.mxu0 0
  %525 = vmatprep.subr.bf16.mxu0 0
  %526 = vmatpush1.bf16.msra.mxu0 0
  %527 = vmatprep.mubr.bf16.mxu0 0
  %528 = vmatmul.mubr.bf16.gmra.mrb[0].mxu0 %v493
  %v529 = vpop.f32.mrb[0].mxu0
  %v530 = vadd.f32 0.0, %v529
  %v531 = vpop.f32.mrb[0].mxu0
  %v532 = vpop.f32.mrb[0].mxu0
  %v533 = vpop.f32.mrb[0].mxu0
  %534 = vdwg.mxu0
  %v535 = vadd.f32 %v471, %v530
  %v536 = vxor.u32 %v535, 2147483648
  %v537 = vmul.f32 %v536, 1.442695
  %v538 = vpow.pop %v537
  %v539 = vadd.f32 %v538, 1.0
  %v540 = vrcp.pop %v539
  %v541 = vmul.f32 1.0, %v540
  %v542 = vadd.f32 %v530, %v234
  %544 = vrot.lane.b32.xlu0 %v542, 64
  %v545 = vpop.permute.xlu0 %544
  %v547 = vmul.f32 %v541, %v545
  %549 = vrot.lane.b32.xlu0 %v547, 64
  %v550 = vpop.permute.xlu0 %549
  %v552 = vadd.f32 %v471, %v550
  %v553 = vtanh.pop %v552
  %v554 = vsub.f32 %v463, %v553
  %556 = vrot.lane.b32.xlu0 %v554, 96
  %v557 = vpop.permute.xlu0 %556
  %v559 = vmul.f32 %v541, %v557
  %561 = vrot.lane.b32.xlu0 %v559, 32
  %v562 = vpop.permute.xlu0 %561
  %v564 = vadd.f32 %v553, %v562
  %566 = vrot.lane.b32.xlu0 %v564, 64
  %v567 = vpop.permute.xlu0 %566
  %s569 = scalar_lea.vmem [#allocation3], 24
  %570 = vst.msk [vmem:[%s569] sm:$0xff] %vm182, %v567
  %s571 = scalar_lea.vmem [#allocation2], 32
  %v572 = vld [vmem:[%s571] sm:$0xff]
  %v573 = vpack.c.bf16 %v564, %v564
  %v574 = vld [vmem:[%s3] sm:$0xf]
  %v575 = vld [vmem:[%s3 + $0x4] sm:$0xf]
  %v576 = vld [vmem:[%s3 + $0x8] sm:$0xf]
  %v577 = vld [vmem:[%s3 + $0xc] sm:$0xf]
  %579 = vrot.lane.b32.xlu0 %v573, 64
  %v580 = vpop.permute.xlu0 %579
  %v585 = vunpack.c.l.b16 %v574
  %v586 = vunpack.c.l.b16 %v575
  %v587 = vunpack.c.l.b16 %v576
  %v588 = vunpack.c.l.b16 %v577
  %v589 = vpack.c.b16 %v586, %v585
  %v590 = vpack.c.b16 %v588, %v587
  %v594 = vsel %vm182, %v580, 0
  %596 = vmatprep.subr.bf16.mxu0 0
  %597 = vmatpush1.bf16.msra.mxu0 %v589
  %598 = vmatprep.subr.bf16.mxu0 0
  %599 = vmatpush1.bf16.msra.mxu0 %v590
  %600 = vmatprep.subr.bf16.mxu0 0
  %601 = vmatpush1.bf16.msra.mxu0 0
  %602 = vmatprep.subr.bf16.mxu0 0
  %603 = vmatpush1.bf16.msra.mxu0 0
  %604 = vmatprep.subr.bf16.mxu0 0
  %605 = vmatpush1.bf16.msra.mxu0 0
  %606 = vmatprep.subr.bf16.mxu0 0
  %607 = vmatpush1.bf16.msra.mxu0 0
  %608 = vmatprep.subr.bf16.mxu0 0
  %609 = vmatpush1.bf16.msra.mxu0 0
  %610 = vmatprep.subr.bf16.mxu0 0
  %611 = vmatpush1.bf16.msra.mxu0 0
  %612 = vmatprep.subr.bf16.mxu0 0
  %613 = vmatpush1.bf16.msra.mxu0 0
  %614 = vmatprep.subr.bf16.mxu0 0
  %615 = vmatpush1.bf16.msra.mxu0 0
  %616 = vmatprep.subr.bf16.mxu0 0
  %617 = vmatpush1.bf16.msra.mxu0 0
  %618 = vmatprep.subr.bf16.mxu0 0
  %619 = vmatpush1.bf16.msra.mxu0 0
  %620 = vmatprep.subr.bf16.mxu0 0
  %621 = vmatpush1.bf16.msra.mxu0 0
  %622 = vmatprep.subr.bf16.mxu0 0
  %623 = vmatpush1.bf16.msra.mxu0 0
  %624 = vmatprep.subr.bf16.mxu0 0
  %625 = vmatpush1.bf16.msra.mxu0 0
  %626 = vmatprep.subr.bf16.mxu0 0
  %627 = vmatpush1.bf16.msra.mxu0 0
  %628 = vmatprep.mubr.bf16.mxu0 0
  %629 = vmatmul.mubr.bf16.gmra.mrb[0].mxu0 %v594
  %v630 = vpop.f32.mrb[0].mxu0
  %v631 = vadd.f32 0.0, %v630
  %v632 = vpop.f32.mrb[0].mxu0
  %v633 = vpop.f32.mrb[0].mxu0
  %v634 = vpop.f32.mrb[0].mxu0
  %635 = vdwg.mxu0
  %v636 = vadd.f32 %v572, %v631
  %v637 = vxor.u32 %v636, 2147483648
  %v638 = vmul.f32 %v637, 1.442695
  %v639 = vpow.pop %v638
  %v640 = vadd.f32 %v639, 1.0
  %v641 = vrcp.pop %v640
  %v642 = vmul.f32 1.0, %v641
  %v643 = vadd.f32 %v631, %v234
  %645 = vrot.lane.b32.xlu0 %v643, 64
  %v646 = vpop.permute.xlu0 %645
  %v648 = vmul.f32 %v642, %v646
  %650 = vrot.lane.b32.xlu0 %v648, 64
  %v651 = vpop.permute.xlu0 %650
  %v653 = vadd.f32 %v572, %v651
  %v654 = vtanh.pop %v653
  %v655 = vsub.f32 %v564, %v654
  %657 = vrot.lane.b32.xlu0 %v655, 96
  %v658 = vpop.permute.xlu0 %657
  %v660 = vmul.f32 %v642, %v658
  %662 = vrot.lane.b32.xlu0 %v660, 32
  %v663 = vpop.permute.xlu0 %662
  %v665 = vadd.f32 %v654, %v663
  %667 = vrot.lane.b32.xlu0 %v665, 64
  %v668 = vpop.permute.xlu0 %667
  %s670 = scalar_lea.vmem [#allocation3], 32
  %671 = vst.msk [vmem:[%s670] sm:$0xff] %vm182, %v668
  %s672 = scalar_lea.vmem [#allocation2], 40
  %v673 = vld [vmem:[%s672] sm:$0xff]
  %v674 = vpack.c.bf16 %v665, %v665
  %v675 = vld [vmem:[%s3] sm:$0xf]
  %v676 = vld [vmem:[%s3 + $0x4] sm:$0xf]
  %v677 = vld [vmem:[%s3 + $0x8] sm:$0xf]
  %v678 = vld [vmem:[%s3 + $0xc] sm:$0xf]
  %680 = vrot.lane.b32.xlu0 %v674, 64
  %v681 = vpop.permute.xlu0 %680
  %v686 = vunpack.c.l.b16 %v675
  %v687 = vunpack.c.l.b16 %v676
  %v688 = vunpack.c.l.b16 %v677
  %v689 = vunpack.c.l.b16 %v678
  %v690 = vpack.c.b16 %v687, %v686
  %v691 = vpack.c.b16 %v689, %v688
  %v695 = vsel %vm182, %v681, 0
  %697 = vmatprep.subr.bf16.mxu0 0
  %698 = vmatpush1.bf16.msra.mxu0 %v690
  %699 = vmatprep.subr.bf16.mxu0 0
  %700 = vmatpush1.bf16.msra.mxu0 %v691
  %701 = vmatprep.subr.bf16.mxu0 0
  %702 = vmatpush1.bf16.msra.mxu0 0
  %703 = vmatprep.subr.bf16.mxu0 0
  %704 = vmatpush1.bf16.msra.mxu0 0
  %705 = vmatprep.subr.bf16.mxu0 0
  %706 = vmatpush1.bf16.msra.mxu0 0
  %707 = vmatprep.subr.bf16.mxu0 0
  %708 = vmatpush1.bf16.msra.mxu0 0
  %709 = vmatprep.subr.bf16.mxu0 0
  %710 = vmatpush1.bf16.msra.mxu0 0
  %711 = vmatprep.subr.bf16.mxu0 0
  %712 = vmatpush1.bf16.msra.mxu0 0
  %713 = vmatprep.subr.bf16.mxu0 0
  %714 = vmatpush1.bf16.msra.mxu0 0
  %715 = vmatprep.subr.bf16.mxu0 0
  %716 = vmatpush1.bf16.msra.mxu0 0
  %717 = vmatprep.subr.bf16.mxu0 0
  %718 = vmatpush1.bf16.msra.mxu0 0
  %719 = vmatprep.subr.bf16.mxu0 0
  %720 = vmatpush1.bf16.msra.mxu0 0
  %721 = vmatprep.subr.bf16.mxu0 0
  %722 = vmatpush1.bf16.msra.mxu0 0
  %723 = vmatprep.subr.bf16.mxu0 0
  %724 = vmatpush1.bf16.msra.mxu0 0
  %725 = vmatprep.subr.bf16.mxu0 0
  %726 = vmatpush1.bf16.msra.mxu0 0
  %727 = vmatprep.subr.bf16.mxu0 0
  %728 = vmatpush1.bf16.msra.mxu0 0
  %729 = vmatprep.mubr.bf16.mxu0 0
  %730 = vmatmul.mubr.bf16.gmra.mrb[0].mxu0 %v695
  %v731 = vpop.f32.mrb[0].mxu0
  %v732 = vadd.f32 0.0, %v731
  %v733 = vpop.f32.mrb[0].mxu0
  %v734 = vpop.f32.mrb[0].mxu0
  %v735 = vpop.f32.mrb[0].mxu0
  %736 = vdwg.mxu0
  %v737 = vadd.f32 %v673, %v732
  %v738 = vxor.u32 %v737, 2147483648
  %v739 = vmul.f32 %v738, 1.442695
  %v740 = vpow.pop %v739
  %v741 = vadd.f32 %v740, 1.0
  %v742 = vrcp.pop %v741
  %v743 = vmul.f32 1.0, %v742
  %v744 = vadd.f32 %v732, %v234
  %746 = vrot.lane.b32.xlu0 %v744, 64
  %v747 = vpop.permute.xlu0 %746
  %v749 = vmul.f32 %v743, %v747
  %751 = vrot.lane.b32.xlu0 %v749, 64
  %v752 = vpop.permute.xlu0 %751
  %v754 = vadd.f32 %v673, %v752
  %v755 = vtanh.pop %v754
  %v756 = vsub.f32 %v665, %v755
  %758 = vrot.lane.b32.xlu0 %v756, 96
  %v759 = vpop.permute.xlu0 %758
  %v761 = vmul.f32 %v743, %v759
  %763 = vrot.lane.b32.xlu0 %v761, 32
  %v764 = vpop.permute.xlu0 %763
  %v766 = vadd.f32 %v755, %v764
  %768 = vrot.lane.b32.xlu0 %v766, 64
  %v769 = vpop.permute.xlu0 %768
  %s771 = scalar_lea.vmem [#allocation3], 40
  %772 = vst.msk [vmem:[%s771] sm:$0xff] %vm182, %v769
  %s773 = scalar_lea.vmem [#allocation2], 48
  %v774 = vld [vmem:[%s773] sm:$0xff]
  %v775 = vpack.c.bf16 %v766, %v766
  %v776 = vld [vmem:[%s3] sm:$0xf]
  %v777 = vld [vmem:[%s3 + $0x4] sm:$0xf]
  %v778 = vld [vmem:[%s3 + $0x8] sm:$0xf]
  %v779 = vld [vmem:[%s3 + $0xc] sm:$0xf]
  %781 = vrot.lane.b32.xlu0 %v775, 64
  %v782 = vpop.permute.xlu0 %781
  %v787 = vunpack.c.l.b16 %v776
  %v788 = vunpack.c.l.b16 %v777
  %v789 = vunpack.c.l.b16 %v778
  %v790 = vunpack.c.l.b16 %v779
  %v791 = vpack.c.b16 %v788, %v787
  %v792 = vpack.c.b16 %v790, %v789
  %v796 = vsel %vm182, %v782, 0
  %798 = vmatprep.subr.bf16.mxu0 0
  %799 = vmatpush1.bf16.msra.mxu0 %v791
  %800 = vmatprep.subr.bf16.mxu0 0
  %801 = vmatpush1.bf16.msra.mxu0 %v792
  %802 = vmatprep.subr.bf16.mxu0 0
  %803 = vmatpush1.bf16.msra.mxu0 0
  %804 = vmatprep.subr.bf16.mxu0 0
  %805 = vmatpush1.bf16.msra.mxu0 0
  %806 = vmatprep.subr.bf16.mxu0 0
  %807 = vmatpush1.bf16.msra.mxu0 0
  %808 = vmatprep.subr.bf16.mxu0 0
  %809 = vmatpush1.bf16.msra.mxu0 0
  %810 = vmatprep.subr.bf16.mxu0 0
  %811 = vmatpush1.bf16.msra.mxu0 0
  %812 = vmatprep.subr.bf16.mxu0 0
  %813 = vmatpush1.bf16.msra.mxu0 0
  %814 = vmatprep.subr.bf16.mxu0 0
  %815 = vmatpush1.bf16.msra.mxu0 0
  %816 = vmatprep.subr.bf16.mxu0 0
  %817 = vmatpush1.bf16.msra.mxu0 0
  %818 = vmatprep.subr.bf16.mxu0 0
  %819 = vmatpush1.bf16.msra.mxu0 0
  %820 = vmatprep.subr.bf16.mxu0 0
  %821 = vmatpush1.bf16.msra.mxu0 0
  %822 = vmatprep.subr.bf16.mxu0 0
  %823 = vmatpush1.bf16.msra.mxu0 0
  %824 = vmatprep.subr.bf16.mxu0 0
  %825 = vmatpush1.bf16.msra.mxu0 0
  %826 = vmatprep.subr.bf16.mxu0 0
  %827 = vmatpush1.bf16.msra.mxu0 0
  %828 = vmatprep.subr.bf16.mxu0 0
  %829 = vmatpush1.bf16.msra.mxu0 0
  %830 = vmatprep.mubr.bf16.mxu0 0
  %831 = vmatmul.mubr.bf16.gmra.mrb[0].mxu0 %v796
  %v832 = vpop.f32.mrb[0].mxu0
  %v833 = vadd.f32 0.0, %v832
  %v834 = vpop.f32.mrb[0].mxu0
  %v835 = vpop.f32.mrb[0].mxu0
  %v836 = vpop.f32.mrb[0].mxu0
  %837 = vdwg.mxu0
  %v838 = vadd.f32 %v774, %v833
  %v839 = vxor.u32 %v838, 2147483648
  %v840 = vmul.f32 %v839, 1.442695
  %v841 = vpow.pop %v840
  %v842 = vadd.f32 %v841, 1.0
  %v843 = vrcp.pop %v842
  %v844 = vmul.f32 1.0, %v843
  %v845 = vadd.f32 %v833, %v234
  %847 = vrot.lane.b32.xlu0 %v845, 64
  %v848 = vpop.permute.xlu0 %847
  %v850 = vmul.f32 %v844, %v848
  %852 = vrot.lane.b32.xlu0 %v850, 64
  %v853 = vpop.permute.xlu0 %852
  %v855 = vadd.f32 %v774, %v853
  %v856 = vtanh.pop %v855
  %v857 = vsub.f32 %v766, %v856
  %859 = vrot.lane.b32.xlu0 %v857, 96
  %v860 = vpop.permute.xlu0 %859
  %v862 = vmul.f32 %v844, %v860
  %864 = vrot.lane.b32.xlu0 %v862, 32
  %v865 = vpop.permute.xlu0 %864
  %v867 = vadd.f32 %v856, %v865
  %869 = vrot.lane.b32.xlu0 %v867, 64
  %v870 = vpop.permute.xlu0 %869
  %s872 = scalar_lea.vmem [#allocation3], 48
  %873 = vst.msk [vmem:[%s872] sm:$0xff] %vm182, %v870
  %s874 = scalar_lea.vmem [#allocation2], 56
  %v875 = vld [vmem:[%s874] sm:$0xff]
  %v876 = vpack.c.bf16 %v867, %v867
  %v877 = vld [vmem:[%s3] sm:$0xf]
  %v878 = vld [vmem:[%s3 + $0x4] sm:$0xf]
  %v879 = vld [vmem:[%s3 + $0x8] sm:$0xf]
  %v880 = vld [vmem:[%s3 + $0xc] sm:$0xf]
  %882 = vrot.lane.b32.xlu0 %v876, 64
  %v883 = vpop.permute.xlu0 %882
  %v888 = vunpack.c.l.b16 %v877
  %v889 = vunpack.c.l.b16 %v878
  %v890 = vunpack.c.l.b16 %v879
  %v891 = vunpack.c.l.b16 %v880
  %v892 = vpack.c.b16 %v889, %v888
  %v893 = vpack.c.b16 %v891, %v890
  %v897 = vsel %vm182, %v883, 0
  %899 = vmatprep.subr.bf16.mxu0 0
  %900 = vmatpush1.bf16.msra.mxu0 %v892
  %901 = vmatprep.subr.bf16.mxu0 0
  %902 = vmatpush1.bf16.msra.mxu0 %v893
  %903 = vmatprep.subr.bf16.mxu0 0
  %904 = vmatpush1.bf16.msra.mxu0 0
  %905 = vmatprep.subr.bf16.mxu0 0
  %906 = vmatpush1.bf16.msra.mxu0 0
  %907 = vmatprep.subr.bf16.mxu0 0
  %908 = vmatpush1.bf16.msra.mxu0 0
  %909 = vmatprep.subr.bf16.mxu0 0
  %910 = vmatpush1.bf16.msra.mxu0 0
  %911 = vmatprep.subr.bf16.mxu0 0
  %912 = vmatpush1.bf16.msra.mxu0 0
  %913 = vmatprep.subr.bf16.mxu0 0
  %914 = vmatpush1.bf16.msra.mxu0 0
  %915 = vmatprep.subr.bf16.mxu0 0
  %916 = vmatpush1.bf16.msra.mxu0 0
  %917 = vmatprep.subr.bf16.mxu0 0
  %918 = vmatpush1.bf16.msra.mxu0 0
  %919 = vmatprep.subr.bf16.mxu0 0
  %920 = vmatpush1.bf16.msra.mxu0 0
  %921 = vmatprep.subr.bf16.mxu0 0
  %922 = vmatpush1.bf16.msra.mxu0 0
  %923 = vmatprep.subr.bf16.mxu0 0
  %924 = vmatpush1.bf16.msra.mxu0 0
  %925 = vmatprep.subr.bf16.mxu0 0
  %926 = vmatpush1.bf16.msra.mxu0 0
  %927 = vmatprep.subr.bf16.mxu0 0
  %928 = vmatpush1.bf16.msra.mxu0 0
  %929 = vmatprep.subr.bf16.mxu0 0
  %930 = vmatpush1.bf16.msra.mxu0 0
  %931 = vmatprep.mubr.bf16.mxu0 0
  %932 = vmatmul.mubr.bf16.gmra.mrb[0].mxu0 %v897
  %v933 = vpop.f32.mrb[0].mxu0
  %v934 = vadd.f32 0.0, %v933
  %v935 = vpop.f32.mrb[0].mxu0
  %v936 = vpop.f32.mrb[0].mxu0
  %v937 = vpop.f32.mrb[0].mxu0
  %938 = vdwg.mxu0
  %v939 = vadd.f32 %v875, %v934
  %v940 = vxor.u32 %v939, 2147483648
  %v941 = vmul.f32 %v940, 1.442695
  %v942 = vpow.pop %v941
  %v943 = vadd.f32 %v942, 1.0
  %v944 = vrcp.pop %v943
  %v945 = vmul.f32 1.0, %v944
  %v946 = vadd.f32 %v934, %v234
  %948 = vrot.lane.b32.xlu0 %v946, 64
  %v949 = vpop.permute.xlu0 %948
  %v951 = vmul.f32 %v945, %v949
  %953 = vrot.lane.b32.xlu0 %v951, 64
  %v954 = vpop.permute.xlu0 %953
  %v956 = vadd.f32 %v875, %v954
  %v957 = vtanh.pop %v956
  %v958 = vsub.f32 %v867, %v957
  %960 = vrot.lane.b32.xlu0 %v958, 96
  %v961 = vpop.permute.xlu0 %960
  %v963 = vmul.f32 %v945, %v961
  %965 = vrot.lane.b32.xlu0 %v963, 32
  %v966 = vpop.permute.xlu0 %965
  %v968 = vadd.f32 %v957, %v966
  %970 = vrot.lane.b32.xlu0 %v968, 64
  %v971 = vpop.permute.xlu0 %970
  %s973 = scalar_lea.vmem [#allocation3], 56
  %974 = vst.msk [vmem:[%s973] sm:$0xff] %vm182, %v971
  %975 = vst.msk [vmem:[%s13] sm:$0xff] %vm182, %v971
  %v976 = vld [vmem:[#allocation3] sm:$0xff]
  %v977 = vld [vmem:[#allocation3 + $0x8] sm:$0xff]
  %v978 = vld [vmem:[#allocation3 + $0x10] sm:$0xff]
  %v979 = vld [vmem:[#allocation3 + $0x18] sm:$0xff]
  %v980 = vld [vmem:[#allocation3 + $0x20] sm:$0xff]
  %v981 = vld [vmem:[#allocation3 + $0x28] sm:$0xff]
  %v982 = vld [vmem:[#allocation3 + $0x30] sm:$0xff]
  %v983 = vld [vmem:[#allocation3 + $0x38] sm:$0xff]
  %v984 = vpack.c.bf16 %v977, %v976
  %v985 = vpack.c.bf16 %v979, %v978
  %v986 = vpack.c.bf16 %v981, %v980
  %v987 = vpack.c.bf16 %v983, %v982
  %v988 = vld [vmem:[%s6] sm:$0xf]
  %v989 = vld [vmem:[%s6 + $0x4] sm:$0xf]
  %v990 = vld [vmem:[%s6 + $0x8] sm:$0xf]
  %v991 = vld [vmem:[%s6 + $0xc] sm:$0xf]
  %v992 = vld [vmem:[%s8] sm:$0x1]
  %v994 = vlaneseq
  %v995 = vshrl.u32 %v994, 7
  %v996 = vsub.s32 0, %v995
  %v997 = vrot.slane %v992, %v996
  %v1003 = vunpack.c.l.b16 %v988
  %v1004 = vunpack.c.l.b16 %v989
  %v1005 = vunpack.c.l.b16 %v990
  %v1006 = vunpack.c.l.b16 %v991
  %v1007 = vpack.c.b16 %v1004, %v1003
  %v1008 = vpack.c.b16 %v1006, %v1005
  %v1012 = vsel %vm182, %v984, 0
  %v1015 = vsel %vm182, %v985, 0
  %v1018 = vsel %vm182, %v986, 0
  %v1021 = vsel %vm182, %v987, 0
  %1023 = vmatprep.subr.bf16.mxu0 0
  %1024 = vmatpush1.bf16.msra.mxu0 %v1007
  %1025 = vmatprep.subr.bf16.mxu0 0
  %1026 = vmatpush1.bf16.msra.mxu0 %v1008
  %1027 = vmatprep.subr.bf16.mxu0 0
  %1028 = vmatpush1.bf16.msra.mxu0 0
  %1029 = vmatprep.subr.bf16.mxu0 0
  %1030 = vmatpush1.bf16.msra.mxu0 0
  %1031 = vmatprep.subr.bf16.mxu0 0
  %1032 = vmatpush1.bf16.msra.mxu0 0
  %1033 = vmatprep.subr.bf16.mxu0 0
  %1034 = vmatpush1.bf16.msra.mxu0 0
  %1035 = vmatprep.subr.bf16.mxu0 0
  %1036 = vmatpush1.bf16.msra.mxu0 0
  %1037 = vmatprep.subr.bf16.mxu0 0
  %1038 = vmatpush1.bf16.msra.mxu0 0
  %1039 = vmatprep.subr.bf16.mxu0 0
  %1040 = vmatpush1.bf16.msra.mxu0 0
  %1041 = vmatprep.subr.bf16.mxu0 0
  %1042 = vmatpush1.bf16.msra.mxu0 0
  %1043 = vmatprep.subr.bf16.mxu0 0
  %1044 = vmatpush1.bf16.msra.mxu0 0
  %1045 = vmatprep.subr.bf16.mxu0 0
  %1046 = vmatpush1.bf16.msra.mxu0 0
  %1047 = vmatprep.subr.bf16.mxu0 0
  %1048 = vmatpush1.bf16.msra.mxu0 0
  %1049 = vmatprep.subr.bf16.mxu0 0
  %1050 = vmatpush1.bf16.msra.mxu0 0
  %1051 = vmatprep.subr.bf16.mxu0 0
  %1052 = vmatpush1.bf16.msra.mxu0 0
  %1053 = vmatprep.subr.bf16.mxu0 0
  %1054 = vmatpush1.bf16.msra.mxu0 0
  %1055 = vmatprep.mubr.bf16.mxu0 0
  %1056 = vmatmul.mubr.bf16.gmra.mrb[0].mxu0 %v1012
  %v1057 = vpop.f32.mrb[0].mxu0
  %v1058 = vadd.f32 %v997, %v1057
  %v1059 = vpop.f32.mrb[0].mxu0
  %v1060 = vpop.f32.mrb[0].mxu0
  %v1061 = vadd.f32 %v997, %v1060
  %v1062 = vpop.f32.mrb[0].mxu0
  %1063 = vmatprep.mubr.bf16.mxu0 0
  %1064 = vmatmul.mubr.bf16.gmra.mrb[0].mxu0 %v1015
  %v1065 = vpop.f32.mrb[0].mxu0
  %v1066 = vadd.f32 %v997, %v1065
  %v1067 = vpop.f32.mrb[0].mxu0
  %v1068 = vpop.f32.mrb[0].mxu0
  %v1069 = vadd.f32 %v997, %v1068
  %v1070 = vpop.f32.mrb[0].mxu0
  %1071 = vmatprep.mubr.bf16.mxu0 0
  %1072 = vmatmul.mubr.bf16.gmra.mrb[0].mxu0 %v1018
  %v1073 = vpop.f32.mrb[0].mxu0
  %v1074 = vadd.f32 %v997, %v1073
  %v1075 = vpop.f32.mrb[0].mxu0
  %v1076 = vpop.f32.mrb[0].mxu0
  %v1077 = vadd.f32 %v997, %v1076
  %v1078 = vpop.f32.mrb[0].mxu0
  %1079 = vmatprep.mubr.bf16.mxu0 0
  %1080 = vmatmul.mubr.bf16.gmra.mrb[0].mxu0 %v1021
  %v1081 = vpop.f32.mrb[0].mxu0
  %v1082 = vadd.f32 %v997, %v1081
  %v1083 = vpop.f32.mrb[0].mxu0
  %v1084 = vpop.f32.mrb[0].mxu0
  %v1085 = vadd.f32 %v997, %v1084
  %v1086 = vpop.f32.mrb[0].mxu0
  %1087 = vdwg.mxu0
  %1088 = vst [vmem:[#allocation2] sm:$0xff] %v1058
  %1089 = vst [vmem:[#allocation2 + $0x8] sm:$0xff] %v1061
  %1090 = vst [vmem:[#allocation2 + $0x10] sm:$0xff] %v1066
  %1091 = vst [vmem:[#allocation2 + $0x18] sm:$0xff] %v1069
  %1092 = vst [vmem:[#allocation2 + $0x20] sm:$0xff] %v1074
  %1093 = vst [vmem:[#allocation2 + $0x28] sm:$0xff] %v1077
  %1094 = vst [vmem:[#allocation2 + $0x30] sm:$0xff] %v1082
  %1095 = vst [vmem:[#allocation2 + $0x38] sm:$0xff] %v1085
  %v1096 = vld [vmem:[%s9] sm:$0x1]
  %v1098 = vlaneseq
  %v1099 = vshrl.u32 %v1098, 7
  %v1100 = vsub.s32 0, %v1099
  %v1101 = vrot.slane %v1096, %v1100
  %s1102 = scalar_lea.vmem %s1, 8
  %v1103 = vld [vmem:[%s1102] sm:$0xff]
  %v1104 = vld [vmem:[#allocation2] sm:$0xff]
  %v1105 = vpack.c.bf16 %v1103, %v1103
  %v1106 = vld [vmem:[%s7] sm:$0xf]
  %v1107 = vld [vmem:[%s7 + $0x4] sm:$0xf]
  %v1108 = vld [vmem:[%s7 + $0x8] sm:$0xf]
  %v1109 = vld [vmem:[%s7 + $0xc] sm:$0xf]
  %v1114 = vunpack.c.l.b16 %v1106
  %v1115 = vunpack.c.l.b16 %v1107
  %v1116 = vunpack.c.l.b16 %v1108
  %v1117 = vunpack.c.l.b16 %v1109
  %v1118 = vpack.c.b16 %v1115, %v1114
  %v1119 = vpack.c.b16 %v1117, %v1116
  %v1123 = vsel %vm182, %v1105, 0
  %1125 = vmatprep.subr.bf16.mxu0 0
  %1126 = vmatpush1.bf16.msra.mxu0 %v1118
  %1127 = vmatprep.subr.bf16.mxu0 0
  %1128 = vmatpush1.bf16.msra.mxu0 %v1119
  %1129 = vmatprep.subr.bf16.mxu0 0
  %1130 = vmatpush1.bf16.msra.mxu0 0
  %1131 = vmatprep.subr.bf16.mxu0 0
  %1132 = vmatpush1.bf16.msra.mxu0 0
  %1133 = vmatprep.subr.bf16.mxu0 0
  %1134 = vmatpush1.bf16.msra.mxu0 0
  %1135 = vmatprep.subr.bf16.mxu0 0
  %1136 = vmatpush1.bf16.msra.mxu0 0
  %1137 = vmatprep.subr.bf16.mxu0 0
  %1138 = vmatpush1.bf16.msra.mxu0 0
  %1139 = vmatprep.subr.bf16.mxu0 0
  %1140 = vmatpush1.bf16.msra.mxu0 0
  %1141 = vmatprep.subr.bf16.mxu0 0
  %1142 = vmatpush1.bf16.msra.mxu0 0
  %1143 = vmatprep.subr.bf16.mxu0 0
  %1144 = vmatpush1.bf16.msra.mxu0 0
  %1145 = vmatprep.subr.bf16.mxu0 0
  %1146 = vmatpush1.bf16.msra.mxu0 0
  %1147 = vmatprep.subr.bf16.mxu0 0
  %1148 = vmatpush1.bf16.msra.mxu0 0
  %1149 = vmatprep.subr.bf16.mxu0 0
  %1150 = vmatpush1.bf16.msra.mxu0 0
  %1151 = vmatprep.subr.bf16.mxu0 0
  %1152 = vmatpush1.bf16.msra.mxu0 0
  %1153 = vmatprep.subr.bf16.mxu0 0
  %1154 = vmatpush1.bf16.msra.mxu0 0
  %1155 = vmatprep.subr.bf16.mxu0 0
  %1156 = vmatpush1.bf16.msra.mxu0 0
  %1157 = vmatprep.mubr.bf16.mxu0 0
  %1158 = vmatmul.mubr.bf16.gmra.mrb[0].mxu0 %v1123
  %v1159 = vpop.f32.mrb[0].mxu0
  %v1160 = vadd.f32 0.0, %v1159
  %v1161 = vpop.f32.mrb[0].mxu0
  %v1162 = vpop.f32.mrb[0].mxu0
  %v1163 = vpop.f32.mrb[0].mxu0
  %1164 = vdwg.mxu0
  %v1165 = vadd.f32 %v1104, %v1160
  %v1166 = vxor.u32 %v1165, 2147483648
  %v1167 = vmul.f32 %v1166, 1.442695
  %v1168 = vpow.pop %v1167
  %v1169 = vadd.f32 %v1168, 1.0
  %v1170 = vrcp.pop %v1169
  %v1171 = vmul.f32 1.0, %v1170
  %1172 = vrot.lane.b32.xlu0 %v1101, 64
  %v1173 = vpop.permute.xlu0 %1172
  %v1175 = vadd.f32 %v1160, %v1173
  %1177 = vrot.lane.b32.xlu0 %v1175, 64
  %v1178 = vpop.permute.xlu0 %1177
  %v1180 = vmul.f32 %v1171, %v1178
  %1182 = vrot.lane.b32.xlu0 %v1180, 64
  %v1183 = vpop.permute.xlu0 %1182
  %v1185 = vadd.f32 %v1104, %v1183
  %v1186 = vtanh.pop %v1185
  %1188 = vrot.lane.b32.xlu0 %v1186, 64
  %v1189 = vpop.permute.xlu0 %1188
  %v1191 = vsub.f32 %v1103, %v1189
  %1193 = vrot.lane.b32.xlu0 %v1191, 32
  %v1194 = vpop.permute.xlu0 %1193
  %v1196 = vmul.f32 %v1171, %v1194
  %1198 = vrot.lane.b32.xlu0 %v1196, 32
  %v1199 = vpop.permute.xlu0 %1198
  %v1201 = vadd.f32 %v1186, %v1199
  %v1202 = vld [vmem:[%s268] sm:$0xff]
  %v1203 = vpack.c.bf16 %v1201, %v1201
  %1205 = vrot.lane.b32.xlu0 %v1203, 64
  %v1206 = vpop.permute.xlu0 %1205
  %v1208 = vsel %vm182, %v1206, 0
  %1210 = vmatprep.subr.bf16.mxu0 0
  %1211 = vmatpush1.bf16.msra.mxu0 %v1118
  %1212 = vmatprep.subr.bf16.mxu0 0
  %1213 = vmatpush1.bf16.msra.mxu0 %v1119
  %1214 = vmatprep.subr.bf16.mxu0 0
  %1215 = vmatpush1.bf16.msra.mxu0 0
  %1216 = vmatprep.subr.bf16.mxu0 0
  %1217 = vmatpush1.bf16.msra.mxu0 0
  %1218 = vmatprep.subr.bf16.mxu0 0
  %1219 = vmatpush1.bf16.msra.mxu0 0
  %1220 = vmatprep.subr.bf16.mxu0 0
  %1221 = vmatpush1.bf16.msra.mxu0 0
  %1222 = vmatprep.subr.bf16.mxu0 0
  %1223 = vmatpush1.bf16.msra.mxu0 0
  %1224 = vmatprep.subr.bf16.mxu0 0
  %1225 = vmatpush1.bf16.msra.mxu0 0
  %1226 = vmatprep.subr.bf16.mxu0 0
  %1227 = vmatpush1.bf16.msra.mxu0 0
  %1228 = vmatprep.subr.bf16.mxu0 0
  %1229 = vmatpush1.bf16.msra.mxu0 0
  %1230 = vmatprep.subr.bf16.mxu0 0
  %1231 = vmatpush1.bf16.msra.mxu0 0
  %1232 = vmatprep.subr.bf16.mxu0 0
  %1233 = vmatpush1.bf16.msra.mxu0 0
  %1234 = vmatprep.subr.bf16.mxu0 0
  %1235 = vmatpush1.bf16.msra.mxu0 0
  %1236 = vmatprep.subr.bf16.mxu0 0
  %1237 = vmatpush1.bf16.msra.mxu0 0
  %1238 = vmatprep.subr.bf16.mxu0 0
  %1239 = vmatpush1.bf16.msra.mxu0 0
  %1240 = vmatprep.subr.bf16.mxu0 0
  %1241 = vmatpush1.bf16.msra.mxu0 0
  %1242 = vmatprep.mubr.bf16.mxu0 0
  %1243 = vmatmul.mubr.bf16.gmra.mrb[0].mxu0 %v1208
  %v1244 = vpop.f32.mrb[0].mxu0
  %v1245 = vadd.f32 0.0, %v1244
  %v1246 = vpop.f32.mrb[0].mxu0
  %v1247 = vpop.f32.mrb[0].mxu0
  %v1248 = vpop.f32.mrb[0].mxu0
  %1249 = vdwg.mxu0
  %v1250 = vadd.f32 %v1202, %v1245
  %v1251 = vxor.u32 %v1250, 2147483648
  %v1252 = vmul.f32 %v1251, 1.442695
  %v1253 = vpow.pop %v1252
  %v1254 = vadd.f32 %v1253, 1.0
  %v1255 = vrcp.pop %v1254
  %v1256 = vmul.f32 1.0, %v1255
  %v1257 = vadd.f32 %v1245, %v1173
  %1259 = vrot.lane.b32.xlu0 %v1257, 64
  %v1260 = vpop.permute.xlu0 %1259
  %v1262 = vmul.f32 %v1256, %v1260
  %1264 = vrot.lane.b32.xlu0 %v1262, 64
  %v1265 = vpop.permute.xlu0 %1264
  %v1267 = vadd.f32 %v1202, %v1265
  %v1268 = vtanh.pop %v1267
  %v1269 = vsub.f32 %v1201, %v1268
  %1271 = vrot.lane.b32.xlu0 %v1269, 96
  %v1272 = vpop.permute.xlu0 %1271
  %v1274 = vmul.f32 %v1256, %v1272
  %1276 = vrot.lane.b32.xlu0 %v1274, 32
  %v1277 = vpop.permute.xlu0 %1276
  %v1279 = vadd.f32 %v1268, %v1277
  %v1280 = vld [vmem:[%s369] sm:$0xff]
  %v1281 = vpack.c.bf16 %v1279, %v1279
  %1283 = vrot.lane.b32.xlu0 %v1281, 64
  %v1284 = vpop.permute.xlu0 %1283
  %v1286 = vsel %vm182, %v1284, 0
  %1288 = vmatprep.subr.bf16.mxu0 0
  %1289 = vmatpush1.bf16.msra.mxu0 %v1118
  %1290 = vmatprep.subr.bf16.mxu0 0
  %1291 = vmatpush1.bf16.msra.mxu0 %v1119
  %1292 = vmatprep.subr.bf16.mxu0 0
  %1293 = vmatpush1.bf16.msra.mxu0 0
  %1294 = vmatprep.subr.bf16.mxu0 0
  %1295 = vmatpush1.bf16.msra.mxu0 0
  %1296 = vmatprep.subr.bf16.mxu0 0
  %1297 = vmatpush1.bf16.msra.mxu0 0
  %1298 = vmatprep.subr.bf16.mxu0 0
  %1299 = vmatpush1.bf16.msra.mxu0 0
  %1300 = vmatprep.subr.bf16.mxu0 0
  %1301 = vmatpush1.bf16.msra.mxu0 0
  %1302 = vmatprep.subr.bf16.mxu0 0
  %1303 = vmatpush1.bf16.msra.mxu0 0
  %1304 = vmatprep.subr.bf16.mxu0 0
  %1305 = vmatpush1.bf16.msra.mxu0 0
  %1306 = vmatprep.subr.bf16.mxu0 0
  %1307 = vmatpush1.bf16.msra.mxu0 0
  %1308 = vmatprep.subr.bf16.mxu0 0
  %1309 = vmatpush1.bf16.msra.mxu0 0
  %1310 = vmatprep.subr.bf16.mxu0 0
  %1311 = vmatpush1.bf16.msra.mxu0 0
  %1312 = vmatprep.subr.bf16.mxu0 0
  %1313 = vmatpush1.bf16.msra.mxu0 0
  %1314 = vmatprep.subr.bf16.mxu0 0
  %1315 = vmatpush1.bf16.msra.mxu0 0
  %1316 = vmatprep.subr.bf16.mxu0 0
  %1317 = vmatpush1.bf16.msra.mxu0 0
  %1318 = vmatprep.subr.bf16.mxu0 0
  %1319 = vmatpush1.bf16.msra.mxu0 0
  %1320 = vmatprep.mubr.bf16.mxu0 0
  %1321 = vmatmul.mubr.bf16.gmra.mrb[0].mxu0 %v1286
  %v1322 = vpop.f32.mrb[0].mxu0
  %v1323 = vadd.f32 0.0, %v1322
  %v1324 = vpop.f32.mrb[0].mxu0
  %v1325 = vpop.f32.mrb[0].mxu0
  %v1326 = vpop.f32.mrb[0].mxu0
  %1327 = vdwg.mxu0
  %v1328 = vadd.f32 %v1280, %v1323
  %v1329 = vxor.u32 %v1328, 2147483648
  %v1330 = vmul.f32 %v1329, 1.442695
  %v1331 = vpow.pop %v1330
  %v1332 = vadd.f32 %v1331, 1.0
  %v1333 = vrcp.pop %v1332
  %v1334 = vmul.f32 1.0, %v1333
  %v1335 = vadd.f32 %v1323, %v1173
  %1337 = vrot.lane.b32.xlu0 %v1335, 64
  %v1338 = vpop.permute.xlu0 %1337
  %v1340 = vmul.f32 %v1334, %v1338
  %1342 = vrot.lane.b32.xlu0 %v1340, 64
  %v1343 = vpop.permute.xlu0 %1342
  %v1345 = vadd.f32 %v1280, %v1343
  %v1346 = vtanh.pop %v1345
  %v1347 = vsub.f32 %v1279, %v1346
  %1349 = vrot.lane.b32.xlu0 %v1347, 96
  %v1350 = vpop.permute.xlu0 %1349
  %v1352 = vmul.f32 %v1334, %v1350
  %1354 = vrot.lane.b32.xlu0 %v1352, 32
  %v1355 = vpop.permute.xlu0 %1354
  %v1357 = vadd.f32 %v1346, %v1355
  %v1358 = vld [vmem:[%s470] sm:$0xff]
  %v1359 = vpack.c.bf16 %v1357, %v1357
  %1361 = vrot.lane.b32.xlu0 %v1359, 64
  %v1362 = vpop.permute.xlu0 %1361
  %v1364 = vsel %vm182, %v1362, 0
  %1366 = vmatprep.subr.bf16.mxu0 0
  %1367 = vmatpush1.bf16.msra.mxu0 %v1118
  %1368 = vmatprep.subr.bf16.mxu0 0
  %1369 = vmatpush1.bf16.msra.mxu0 %v1119
  %1370 = vmatprep.subr.bf16.mxu0 0
  %1371 = vmatpush1.bf16.msra.mxu0 0
  %1372 = vmatprep.subr.bf16.mxu0 0
  %1373 = vmatpush1.bf16.msra.mxu0 0
  %1374 = vmatprep.subr.bf16.mxu0 0
  %1375 = vmatpush1.bf16.msra.mxu0 0
  %1376 = vmatprep.subr.bf16.mxu0 0
  %1377 = vmatpush1.bf16.msra.mxu0 0
  %1378 = vmatprep.subr.bf16.mxu0 0
  %1379 = vmatpush1.bf16.msra.mxu0 0
  %1380 = vmatprep.subr.bf16.mxu0 0
  %1381 = vmatpush1.bf16.msra.mxu0 0
  %1382 = vmatprep.subr.bf16.mxu0 0
  %1383 = vmatpush1.bf16.msra.mxu0 0
  %1384 = vmatprep.subr.bf16.mxu0 0
  %1385 = vmatpush1.bf16.msra.mxu0 0
  %1386 = vmatprep.subr.bf16.mxu0 0
  %1387 = vmatpush1.bf16.msra.mxu0 0
  %1388 = vmatprep.subr.bf16.mxu0 0
  %1389 = vmatpush1.bf16.msra.mxu0 0
  %1390 = vmatprep.subr.bf16.mxu0 0
  %1391 = vmatpush1.bf16.msra.mxu0 0
  %1392 = vmatprep.subr.bf16.mxu0 0
  %1393 = vmatpush1.bf16.msra.mxu0 0
  %1394 = vmatprep.subr.bf16.mxu0 0
  %1395 = vmatpush1.bf16.msra.mxu0 0
  %1396 = vmatprep.subr.bf16.mxu0 0
  %1397 = vmatpush1.bf16.msra.mxu0 0
  %1398 = vmatprep.mubr.bf16.mxu0 0
  %1399 = vmatmul.mubr.bf16.gmra.mrb[0].mxu0 %v1364
  %v1400 = vpop.f32.mrb[0].mxu0
  %v1401 = vadd.f32 0.0, %v1400
  %v1402 = vpop.f32.mrb[0].mxu0
  %v1403 = vpop.f32.mrb[0].mxu0
  %v1404 = vpop.f32.mrb[0].mxu0
  %1405 = vdwg.mxu0
  %v1406 = vadd.f32 %v1358, %v1401
  %v1407 = vxor.u32 %v1406, 2147483648
  %v1408 = vmul.f32 %v1407, 1.442695
  %v1409 = vpow.pop %v1408
  %v1410 = vadd.f32 %v1409, 1.0
  %v1411 = vrcp.pop %v1410
  %v1412 = vmul.f32 1.0, %v1411
  %v1413 = vadd.f32 %v1401, %v1173
  %1415 = vrot.lane.b32.xlu0 %v1413, 64
  %v1416 = vpop.permute.xlu0 %1415
  %v1418 = vmul.f32 %v1412, %v1416
  %1420 = vrot.lane.b32.xlu0 %v1418, 64
  %v1421 = vpop.permute.xlu0 %1420
  %v1423 = vadd.f32 %v1358, %v1421
  %v1424 = vtanh.pop %v1423
  %v1425 = vsub.f32 %v1357, %v1424
  %1427 = vrot.lane.b32.xlu0 %v1425, 96
  %v1428 = vpop.permute.xlu0 %1427
  %v1430 = vmul.f32 %v1412, %v1428
  %1432 = vrot.lane.b32.xlu0 %v1430, 32
  %v1433 = vpop.permute.xlu0 %1432
  %v1435 = vadd.f32 %v1424, %v1433
  %v1436 = vld [vmem:[%s571] sm:$0xff]
  %v1437 = vpack.c.bf16 %v1435, %v1435
  %1439 = vrot.lane.b32.xlu0 %v1437, 64
  %v1440 = vpop.permute.xlu0 %1439
  %v1442 = vsel %vm182, %v1440, 0
  %1444 = vmatprep.subr.bf16.mxu0 0
  %1445 = vmatpush1.bf16.msra.mxu0 %v1118
  %1446 = vmatprep.subr.bf16.mxu0 0
  %1447 = vmatpush1.bf16.msra.mxu0 %v1119
  %1448 = vmatprep.subr.bf16.mxu0 0
  %1449 = vmatpush1.bf16.msra.mxu0 0
  %1450 = vmatprep.subr.bf16.mxu0 0
  %1451 = vmatpush1.bf16.msra.mxu0 0
  %1452 = vmatprep.subr.bf16.mxu0 0
  %1453 = vmatpush1.bf16.msra.mxu0 0
  %1454 = vmatprep.subr.bf16.mxu0 0
  %1455 = vmatpush1.bf16.msra.mxu0 0
  %1456 = vmatprep.subr.bf16.mxu0 0
  %1457 = vmatpush1.bf16.msra.mxu0 0
  %1458 = vmatprep.subr.bf16.mxu0 0
  %1459 = vmatpush1.bf16.msra.mxu0 0
  %1460 = vmatprep.subr.bf16.mxu0 0
  %1461 = vmatpush1.bf16.msra.mxu0 0
  %1462 = vmatprep.subr.bf16.mxu0 0
  %1463 = vmatpush1.bf16.msra.mxu0 0
  %1464 = vmatprep.subr.bf16.mxu0 0
  %1465 = vmatpush1.bf16.msra.mxu0 0
  %1466 = vmatprep.subr.bf16.mxu0 0
  %1467 = vmatpush1.bf16.msra.mxu0 0
  %1468 = vmatprep.subr.bf16.mxu0 0
  %1469 = vmatpush1.bf16.msra.mxu0 0
  %1470 = vmatprep.subr.bf16.mxu0 0
  %1471 = vmatpush1.bf16.msra.mxu0 0
  %1472 = vmatprep.subr.bf16.mxu0 0
  %1473 = vmatpush1.bf16.msra.mxu0 0
  %1474 = vmatprep.subr.bf16.mxu0 0
  %1475 = vmatpush1.bf16.msra.mxu0 0
  %1476 = vmatprep.mubr.bf16.mxu0 0
  %1477 = vmatmul.mubr.bf16.gmra.mrb[0].mxu0 %v1442
  %v1478 = vpop.f32.mrb[0].mxu0
  %v1479 = vadd.f32 0.0, %v1478
  %v1480 = vpop.f32.mrb[0].mxu0
  %v1481 = vpop.f32.mrb[0].mxu0
  %v1482 = vpop.f32.mrb[0].mxu0
  %1483 = vdwg.mxu0
  %v1484 = vadd.f32 %v1436, %v1479
  %v1485 = vxor.u32 %v1484, 2147483648
  %v1486 = vmul.f32 %v1485, 1.442695
  %v1487 = vpow.pop %v1486
  %v1488 = vadd.f32 %v1487, 1.0
  %v1489 = vrcp.pop %v1488
  %v1490 = vmul.f32 1.0, %v1489
  %v1491 = vadd.f32 %v1479, %v1173
  %1493 = vrot.lane.b32.xlu0 %v1491, 64
  %v1494 = vpop.permute.xlu0 %1493
  %v1496 = vmul.f32 %v1490, %v1494
  %1498 = vrot.lane.b32.xlu0 %v1496, 64
  %v1499 = vpop.permute.xlu0 %1498
  %v1501 = vadd.f32 %v1436, %v1499
  %v1502 = vtanh.pop %v1501
  %v1503 = vsub.f32 %v1435, %v1502
  %1505 = vrot.lane.b32.xlu0 %v1503, 96
  %v1506 = vpop.permute.xlu0 %1505
  %v1508 = vmul.f32 %v1490, %v1506
  %1510 = vrot.lane.b32.xlu0 %v1508, 32
  %v1511 = vpop.permute.xlu0 %1510
  %v1513 = vadd.f32 %v1502, %v1511
  %v1514 = vld [vmem:[%s672] sm:$0xff]
  %v1515 = vpack.c.bf16 %v1513, %v1513
  %1517 = vrot.lane.b32.xlu0 %v1515, 64
  %v1518 = vpop.permute.xlu0 %1517
  %v1520 = vsel %vm182, %v1518, 0
  %1522 = vmatprep.subr.bf16.mxu0 0
  %1523 = vmatpush1.bf16.msra.mxu0 %v1118
  %1524 = vmatprep.subr.bf16.mxu0 0
  %1525 = vmatpush1.bf16.msra.mxu0 %v1119
  %1526 = vmatprep.subr.bf16.mxu0 0
  %1527 = vmatpush1.bf16.msra.mxu0 0
  %1528 = vmatprep.subr.bf16.mxu0 0
  %1529 = vmatpush1.bf16.msra.mxu0 0
  %1530 = vmatprep.subr.bf16.mxu0 0
  %1531 = vmatpush1.bf16.msra.mxu0 0
  %1532 = vmatprep.subr.bf16.mxu0 0
  %1533 = vmatpush1.bf16.msra.mxu0 0
  %1534 = vmatprep.subr.bf16.mxu0 0
  %1535 = vmatpush1.bf16.msra.mxu0 0
  %1536 = vmatprep.subr.bf16.mxu0 0
  %1537 = vmatpush1.bf16.msra.mxu0 0
  %1538 = vmatprep.subr.bf16.mxu0 0
  %1539 = vmatpush1.bf16.msra.mxu0 0
  %1540 = vmatprep.subr.bf16.mxu0 0
  %1541 = vmatpush1.bf16.msra.mxu0 0
  %1542 = vmatprep.subr.bf16.mxu0 0
  %1543 = vmatpush1.bf16.msra.mxu0 0
  %1544 = vmatprep.subr.bf16.mxu0 0
  %1545 = vmatpush1.bf16.msra.mxu0 0
  %1546 = vmatprep.subr.bf16.mxu0 0
  %1547 = vmatpush1.bf16.msra.mxu0 0
  %1548 = vmatprep.subr.bf16.mxu0 0
  %1549 = vmatpush1.bf16.msra.mxu0 0
  %1550 = vmatprep.subr.bf16.mxu0 0
  %1551 = vmatpush1.bf16.msra.mxu0 0
  %1552 = vmatprep.subr.bf16.mxu0 0
  %1553 = vmatpush1.bf16.msra.mxu0 0
  %1554 = vmatprep.mubr.bf16.mxu0 0
  %1555 = vmatmul.mubr.bf16.gmra.mrb[0].mxu0 %v1520
  %v1556 = vpop.f32.mrb[0].mxu0
  %v1557 = vadd.f32 0.0, %v1556
  %v1558 = vpop.f32.mrb[0].mxu0
  %v1559 = vpop.f32.mrb[0].mxu0
  %v1560 = vpop.f32.mrb[0].mxu0
  %1561 = vdwg.mxu0
  %v1562 = vadd.f32 %v1514, %v1557
  %v1563 = vxor.u32 %v1562, 2147483648
  %v1564 = vmul.f32 %v1563, 1.442695
  %v1565 = vpow.pop %v1564
  %v1566 = vadd.f32 %v1565, 1.0
  %v1567 = vrcp.pop %v1566
  %v1568 = vmul.f32 1.0, %v1567
  %v1569 = vadd.f32 %v1557, %v1173
  %1571 = vrot.lane.b32.xlu0 %v1569, 64
  %v1572 = vpop.permute.xlu0 %1571
  %v1574 = vmul.f32 %v1568, %v1572
  %1576 = vrot.lane.b32.xlu0 %v1574, 64
  %v1577 = vpop.permute.xlu0 %1576
  %v1579 = vadd.f32 %v1514, %v1577
  %v1580 = vtanh.pop %v1579
  %v1581 = vsub.f32 %v1513, %v1580
  %1583 = vrot.lane.b32.xlu0 %v1581, 96
  %v1584 = vpop.permute.xlu0 %1583
  %v1586 = vmul.f32 %v1568, %v1584
  %1588 = vrot.lane.b32.xlu0 %v1586, 32
  %v1589 = vpop.permute.xlu0 %1588
  %v1591 = vadd.f32 %v1580, %v1589
  %v1592 = vld [vmem:[%s773] sm:$0xff]
  %v1593 = vpack.c.bf16 %v1591, %v1591
  %1595 = vrot.lane.b32.xlu0 %v1593, 64
  %v1596 = vpop.permute.xlu0 %1595
  %v1598 = vsel %vm182, %v1596, 0
  %1600 = vmatprep.subr.bf16.mxu0 0
  %1601 = vmatpush1.bf16.msra.mxu0 %v1118
  %1602 = vmatprep.subr.bf16.mxu0 0
  %1603 = vmatpush1.bf16.msra.mxu0 %v1119
  %1604 = vmatprep.subr.bf16.mxu0 0
  %1605 = vmatpush1.bf16.msra.mxu0 0
  %1606 = vmatprep.subr.bf16.mxu0 0
  %1607 = vmatpush1.bf16.msra.mxu0 0
  %1608 = vmatprep.subr.bf16.mxu0 0
  %1609 = vmatpush1.bf16.msra.mxu0 0
  %1610 = vmatprep.subr.bf16.mxu0 0
  %1611 = vmatpush1.bf16.msra.mxu0 0
  %1612 = vmatprep.subr.bf16.mxu0 0
  %1613 = vmatpush1.bf16.msra.mxu0 0
  %1614 = vmatprep.subr.bf16.mxu0 0
  %1615 = vmatpush1.bf16.msra.mxu0 0
  %1616 = vmatprep.subr.bf16.mxu0 0
  %1617 = vmatpush1.bf16.msra.mxu0 0
  %1618 = vmatprep.subr.bf16.mxu0 0
  %1619 = vmatpush1.bf16.msra.mxu0 0
  %1620 = vmatprep.subr.bf16.mxu0 0
  %1621 = vmatpush1.bf16.msra.mxu0 0
  %1622 = vmatprep.subr.bf16.mxu0 0
  %1623 = vmatpush1.bf16.msra.mxu0 0
  %1624 = vmatprep.subr.bf16.mxu0 0
  %1625 = vmatpush1.bf16.msra.mxu0 0
  %1626 = vmatprep.subr.bf16.mxu0 0
  %1627 = vmatpush1.bf16.msra.mxu0 0
  %1628 = vmatprep.subr.bf16.mxu0 0
  %1629 = vmatpush1.bf16.msra.mxu0 0
  %1630 = vmatprep.subr.bf16.mxu0 0
  %1631 = vmatpush1.bf16.msra.mxu0 0
  %1632 = vmatprep.mubr.bf16.mxu0 0
  %1633 = vmatmul.mubr.bf16.gmra.mrb[0].mxu0 %v1598
  %v1634 = vpop.f32.mrb[0].mxu0
  %v1635 = vadd.f32 0.0, %v1634
  %v1636 = vpop.f32.mrb[0].mxu0
  %v1637 = vpop.f32.mrb[0].mxu0
  %v1638 = vpop.f32.mrb[0].mxu0
  %1639 = vdwg.mxu0
  %v1640 = vadd.f32 %v1592, %v1635
  %v1641 = vxor.u32 %v1640, 2147483648
  %v1642 = vmul.f32 %v1641, 1.442695
  %v1643 = vpow.pop %v1642
  %v1644 = vadd.f32 %v1643, 1.0
  %v1645 = vrcp.pop %v1644
  %v1646 = vmul.f32 1.0, %v1645
  %v1647 = vadd.f32 %v1635, %v1173
  %1649 = vrot.lane.b32.xlu0 %v1647, 64
  %v1650 = vpop.permute.xlu0 %1649
  %v1652 = vmul.f32 %v1646, %v1650
  %1654 = vrot.lane.b32.xlu0 %v1652, 64
  %v1655 = vpop.permute.xlu0 %1654
  %v1657 = vadd.f32 %v1592, %v1655
  %v1658 = vtanh.pop %v1657
  %v1659 = vsub.f32 %v1591, %v1658
  %1661 = vrot.lane.b32.xlu0 %v1659, 96
  %v1662 = vpop.permute.xlu0 %1661
  %v1664 = vmul.f32 %v1646, %v1662
  %1666 = vrot.lane.b32.xlu0 %v1664, 32
  %v1667 = vpop.permute.xlu0 %1666
  %v1669 = vadd.f32 %v1658, %v1667
  %v1670 = vld [vmem:[%s874] sm:$0xff]
  %v1671 = vpack.c.bf16 %v1669, %v1669
  %1673 = vrot.lane.b32.xlu0 %v1671, 64
  %v1674 = vpop.permute.xlu0 %1673
  %v1676 = vsel %vm182, %v1674, 0
  %1678 = vmatprep.subr.bf16.mxu0 0
  %1679 = vmatpush1.bf16.msra.mxu0 %v1118
  %1680 = vmatprep.subr.bf16.mxu0 0
  %1681 = vmatpush1.bf16.msra.mxu0 %v1119
  %1682 = vmatprep.subr.bf16.mxu0 0
  %1683 = vmatpush1.bf16.msra.mxu0 0
  %1684 = vmatprep.subr.bf16.mxu0 0
  %1685 = vmatpush1.bf16.msra.mxu0 0
  %1686 = vmatprep.subr.bf16.mxu0 0
  %1687 = vmatpush1.bf16.msra.mxu0 0
  %1688 = vmatprep.subr.bf16.mxu0 0
  %1689 = vmatpush1.bf16.msra.mxu0 0
  %1690 = vmatprep.subr.bf16.mxu0 0
  %1691 = vmatpush1.bf16.msra.mxu0 0
  %1692 = vmatprep.subr.bf16.mxu0 0
  %1693 = vmatpush1.bf16.msra.mxu0 0
  %1694 = vmatprep.subr.bf16.mxu0 0
  %1695 = vmatpush1.bf16.msra.mxu0 0
  %1696 = vmatprep.subr.bf16.mxu0 0
  %1697 = vmatpush1.bf16.msra.mxu0 0
  %1698 = vmatprep.subr.bf16.mxu0 0
  %1699 = vmatpush1.bf16.msra.mxu0 0
  %1700 = vmatprep.subr.bf16.mxu0 0
  %1701 = vmatpush1.bf16.msra.mxu0 0
  %1702 = vmatprep.subr.bf16.mxu0 0
  %1703 = vmatpush1.bf16.msra.mxu0 0
  %1704 = vmatprep.subr.bf16.mxu0 0
  %1705 = vmatpush1.bf16.msra.mxu0 0
  %1706 = vmatprep.subr.bf16.mxu0 0
  %1707 = vmatpush1.bf16.msra.mxu0 0
  %1708 = vmatprep.subr.bf16.mxu0 0
  %1709 = vmatpush1.bf16.msra.mxu0 0
  %1710 = vmatprep.mubr.bf16.mxu0 0
  %1711 = vmatmul.mubr.bf16.gmra.mrb[0].mxu0 %v1676
  %v1712 = vpop.f32.mrb[0].mxu0
  %v1713 = vadd.f32 0.0, %v1712
  %v1714 = vpop.f32.mrb[0].mxu0
  %v1715 = vpop.f32.mrb[0].mxu0
  %v1716 = vpop.f32.mrb[0].mxu0
  %1717 = vdwg.mxu0
  %v1718 = vadd.f32 %v1670, %v1713
  %v1719 = vxor.u32 %v1718, 2147483648
  %v1720 = vmul.f32 %v1719, 1.442695
  %v1721 = vpow.pop %v1720
  %v1722 = vadd.f32 %v1721, 1.0
  %v1723 = vrcp.pop %v1722
  %v1724 = vmul.f32 1.0, %v1723
  %v1725 = vadd.f32 %v1713, %v1173
  %1727 = vrot.lane.b32.xlu0 %v1725, 64
  %v1728 = vpop.permute.xlu0 %1727
  %v1730 = vmul.f32 %v1724, %v1728
  %1732 = vrot.lane.b32.xlu0 %v1730, 64
  %v1733 = vpop.permute.xlu0 %1732
  %v1735 = vadd.f32 %v1670, %v1733
  %v1736 = vtanh.pop %v1735
  %v1737 = vsub.f32 %v1669, %v1736
  %1739 = vrot.lane.b32.xlu0 %v1737, 96
  %v1740 = vpop.permute.xlu0 %1739
  %v1742 = vmul.f32 %v1724, %v1740
  %1744 = vrot.lane.b32.xlu0 %v1742, 32
  %v1745 = vpop.permute.xlu0 %1744
  %v1747 = vadd.f32 %v1736, %v1745
  %1749 = vrot.lane.b32.xlu0 %v1747, 64
  %v1750 = vpop.permute.xlu0 %1749
  %s1752 = scalar_lea.vmem %s13, 8
  %1753 = vst.msk [vmem:[%s1752] sm:$0xff] %vm182, %v1750
  %v1754 = vmax.f32 %v1747, 0.0
  %v1755 = vpack.c.bf16 %v1754, %v1754
  %v1756 = vld [vmem:[%s10] sm:$0xf]
  %v1757 = vld [vmem:[%s10 + $0x4] sm:$0xf]
  %v1758 = vld [vmem:[%s10 + $0x8] sm:$0xf]
  %v1759 = vld [vmem:[%s10 + $0xc] sm:$0xf]
  %v1760 = vld [vmem:[%s11] sm:$0x1]
  %v1762 = vlaneseq
  %v1763 = vshrl.u32 %v1762, 7
  %v1764 = vsub.s32 0, %v1763
  %v1765 = vrot.slane %v1760, %v1764
  %1768 = vrot.lane.b32.xlu0 %v1755, 64
  %v1769 = vpop.permute.xlu0 %1768
  %v1774 = vunpack.c.l.b16 %v1756
  %v1775 = vunpack.c.l.b16 %v1757
  %v1776 = vunpack.c.l.b16 %v1758
  %v1777 = vunpack.c.l.b16 %v1759
  %v1778 = vpack.c.b16 %v1775, %v1774
  %v1779 = vpack.c.b16 %v1777, %v1776
  %v1783 = vsel %vm182, %v1769, 0
  %1785 = vmatprep.subr.bf16.mxu0 0
  %1786 = vmatpush1.bf16.msra.mxu0 %v1778
  %1787 = vmatprep.subr.bf16.mxu0 0
  %1788 = vmatpush1.bf16.msra.mxu0 %v1779
  %1789 = vmatprep.subr.bf16.mxu0 0
  %1790 = vmatpush1.bf16.msra.mxu0 0
  %1791 = vmatprep.subr.bf16.mxu0 0
  %1792 = vmatpush1.bf16.msra.mxu0 0
  %1793 = vmatprep.subr.bf16.mxu0 0
  %1794 = vmatpush1.bf16.msra.mxu0 0
  %1795 = vmatprep.subr.bf16.mxu0 0
  %1796 = vmatpush1.bf16.msra.mxu0 0
  %1797 = vmatprep.subr.bf16.mxu0 0
  %1798 = vmatpush1.bf16.msra.mxu0 0
  %1799 = vmatprep.subr.bf16.mxu0 0
  %1800 = vmatpush1.bf16.msra.mxu0 0
  %1801 = vmatprep.subr.bf16.mxu0 0
  %1802 = vmatpush1.bf16.msra.mxu0 0
  %1803 = vmatprep.subr.bf16.mxu0 0
  %1804 = vmatpush1.bf16.msra.mxu0 0
  %1805 = vmatprep.subr.bf16.mxu0 0
  %1806 = vmatpush1.bf16.msra.mxu0 0
  %1807 = vmatprep.subr.bf16.mxu0 0
  %1808 = vmatpush1.bf16.msra.mxu0 0
  %1809 = vmatprep.subr.bf16.mxu0 0
  %1810 = vmatpush1.bf16.msra.mxu0 0
  %1811 = vmatprep.subr.bf16.mxu0 0
  %1812 = vmatpush1.bf16.msra.mxu0 0
  %1813 = vmatprep.subr.bf16.mxu0 0
  %1814 = vmatpush1.bf16.msra.mxu0 0
  %1815 = vmatprep.subr.bf16.mxu0 0
  %1816 = vmatpush1.bf16.msra.mxu0 0
  %1817 = vmatprep.mubr.bf16.mxu0 0
  %1818 = vmatmul.mubr.bf16.gmra.mrb[0].mxu0 %v1783
  %v1819 = vpop.f32.mrb[0].mxu0
  %v1820 = vadd.f32 %v1765, %v1819
  %v1821 = vpop.f32.mrb[0].mxu0
  %v1822 = vpop.f32.mrb[0].mxu0
  %v1823 = vpop.f32.mrb[0].mxu0
  %1824 = vdwg.mxu0
  %1825 = vst [vmem:[%s12] sm:$0xff] %v1820
  // Predicated region
  $region50: #{gru_net_forward.1} parent=0 // pred_check
    _
  $region51: #{gru_net_forward.1} parent=0 // pred_check_branch
    %1827 = sbr.rel (0) target = $region53
  $region52: #{gru_net_forward.1} parent=0 // pred_region
    _
  $region53: #{gru_net_forward.1} parent=0 // pred_fallthru
    _
  // Predicated region
  $region54: #{gru_net_forward.1} parent=0 // pred_check
    _
  $region55: #{gru_net_forward.1} parent=0 // pred_check_branch
    %1829 = sbr.rel (0) target = $region57
  $region56: #{gru_net_forward.1} parent=0 // pred_region
    _
  $region57: #{gru_net_forward.1} parent=0 // pred_fallthru
    _
  // Predicated region
  $region58: #{gru_net_forward.1} parent=0 // pred_check
    _
  $region59: #{gru_net_forward.1} parent=0 // pred_check_branch
    %1831 = sbr.rel (0) target = $region61
  $region60: #{gru_net_forward.1} parent=0 // pred_region
    _
  $region61: #{gru_net_forward.1} parent=0 // pred_fallthru
    _
  // Predicated region
  $region62: #{gru_net_forward.1} parent=0 // pred_check
    _
  $region63: #{gru_net_forward.1} parent=0 // pred_check_branch
    %1833 = sbr.rel (0) target = $region65
  $region64: #{gru_net_forward.1} parent=0 // pred_region
    _
  $region65: #{gru_net_forward.1} parent=0 // pred_fallthru
    _

</llo_original>
